<compile_context>
chip_gen: v6e
topology: v6e:2x2x1
jax: 0.10.0
libtpu: 0.0.40
codegen_flags: <defaults>
</compile_context>

<pallas_src>
import math

import numpy as np
import jax
import jax.numpy as jnp
from jax import lax
from jax.experimental import pallas as pl
from jax.experimental.pallas import tpu as pltpu


# ----------------------------------------------------------------------------
# Fused Pallas kernel
# ----------------------------------------------------------------------------
def _simple_graphconv_kernel(x_ref, wstack_ref, adj_ref, diag_ref, gb_ref, o_ref):
    """Fused SemGraphConv + training-mode BatchNorm1d + ReLU.

    VMEM-resident shapes (single invocation, ~30 KiB total):
      x       (B, J, Cin)
      wstack  (2*Cin, Cout)   = vstack([W0, W1])
      adj     (J, J)          off-diagonal part of the row-softmaxed adjacency
      diag    (J, 1)          diagonal of the row-softmaxed adjacency
      gb      (2, Cout)       [gamma; beta]
      out     (B*J, Cout)
    """
    b, j, cin = x_ref.shape
    x = x_ref[...]

    # Off-diagonal neighbour aggregation, contracting the Cin-narrow x:
    # batched (J,J)@(J,Cin) MXU passes, adjacency kept at (J,J) for any B.
    adj_b = jnp.broadcast_to(adj_ref[...], (b, j, j))
    a = jnp.einsum("bjk,bkc->bjc", adj_b, x, preferred_element_type=jnp.float32)

    # Diagonal part of the softmaxed adjacency is a per-row scale on x (VPU, 32 lanes).
    z = jnp.concatenate([diag_ref[...] * x, a], axis=-1)        # (B, J, 2*Cin)
    z2 = z.reshape(b * j, 2 * cin)                              # collapse leading dims (J % 8 == 0)

    # Single K-stacked weight projection: [diag*x | adj_off@x] @ [W0; W1].
    g = jnp.dot(z2, wstack_ref[...], preferred_element_type=jnp.float32)   # (B*J, Cout)

    # Training-mode BatchNorm1d over all B*J rows (two-pass variance), then ReLU.
    # (SemGraphConv bias omitted: exactly cancelled by the mean subtraction.)
    gb = gb_ref[...]
    mean = jnp.mean(g, axis=0, keepdims=True)
    var = jnp.mean((g - mean) ** 2, axis=0, keepdims=True)
    norm = (g - mean) * lax.rsqrt(var + 1e-5)
    o_ref[...] = jnp.maximum(norm * gb[0:1, :] + gb[1:2, :], 0.0)


# ----------------------------------------------------------------------------
# Wrapper
# ----------------------------------------------------------------------------
def simple_graph_conv(x, params):
    """_Simple_GraphConv.forward in (B, J, C) channels-last layout."""
    b, j, _ = x.shape
    cout = params["Wstack"].shape[1]
    vmem_spec = pl.BlockSpec(memory_space=pltpu.MemorySpace.VMEM)
    out2d = pl.pallas_call(
        _simple_graphconv_kernel,
        out_shape=jax.ShapeDtypeStruct((b * j, cout), jnp.float32),
        in_specs=[vmem_spec] * 5,
        out_specs=vmem_spec,
    )(x, params["Wstack"], params["adj_off"], params["adj_diag_col"], params["bn_gb"])
    return out2d.reshape(b, j, cout)


# ----------------------------------------------------------------------------
# Deterministic parameter construction (shapes follow the torch __init__)
# ----------------------------------------------------------------------------
def init_params(key, adj_np, cin, cout):
    j = adj_np.shape[0]
    ks = jax.random.split(key, 6)

    # SemGraphConv: W (2, Cin, Cout) xavier_uniform(gain=1.414), e on adj>0, bias.
    bound = 1.414 * math.sqrt(6.0 / (cin + cout))
    w0 = jax.random.uniform(ks[0], (cin, cout), jnp.float32, -bound, bound)
    w1 = jax.random.uniform(ks[1], (cin, cout), jnp.float32, -bound, bound)

    mask = adj_np > 0
    rows, cols = np.nonzero(mask)
    # torch inits e to 1; perturb slightly so the softmax is non-uniform and the
    # full adjacency compute path is exercised.
    e = 1.0 + 0.1 * jax.random.normal(ks[2], (rows.shape[0],), jnp.float32)
    logits = jnp.full((j, j), -9.0e15, jnp.float32).at[rows, cols].set(e)
    adj_soft = jax.nn.softmax(logits, axis=1)          # parameter-only preprocessing

    stdv = 1.0 / math.sqrt(cout)
    bias = jax.random.uniform(ks[3], (1, cout), jnp.float32, -stdv, stdv)  # reference only

    # Fresh BN has gamma=1/beta=0; perturb slightly so the affine is exercised.
    bn_gamma = 1.0 + 0.1 * jax.random.normal(ks[4], (1, cout), jnp.float32)
    bn_beta = 0.1 * jax.random.normal(ks[5], (1, cout), jnp.float32)

    # Fold parameters into the forms the fused kernel consumes (done once, outside):
    eye_j = jnp.eye(j, dtype=jnp.float32)
    adj_off = adj_soft * (1.0 - eye_j)                       # (J, J)   off-diagonal
    adj_diag_col = jnp.diagonal(adj_soft)[:, None]           # (J, 1)   diagonal
    w_stack = jnp.concatenate([w0, w1], axis=0)              # (2*Cin, Cout)
    bn_gb = jnp.concatenate([bn_gamma, bn_beta], axis=0)     # (2, Cout)

    return dict(W0=w0, W1=w1, adj_soft=adj_soft, bias=bias,
                bn_gamma=bn_gamma, bn_beta=bn_beta,
                Wstack=w_stack, adj_off=adj_off, adj_diag_col=adj_diag_col,
                bn_gb=bn_gb)


# ----------------------------------------------------------------------------
# Pure-JAX reference (mirrors the torch forward, including the bias) for sanity
# ----------------------------------------------------------------------------
def ref_simple_graph_conv(x, adj_soft, w0, w1, bias, gamma, beta):
    hp = lax.Precision.HIGHEST
    h0 = jnp.matmul(x, w0, precision=hp)
    h1 = jnp.matmul(x, w1, precision=hp)
    j = adj_soft.shape[0]
    eye = jnp.eye(j, dtype=jnp.float32)
    g = (jnp.einsum("ij,bjc->bic", adj_soft * eye, h0, precision=hp)
         + jnp.einsum("ij,bjc->bic", adj_soft * (1.0 - eye), h1, precision=hp)
         + bias)
    mean = g.mean(axis=(0, 1), keepdims=True)
    var = ((g - mean) ** 2).mean(axis=(0, 1), keepdims=True)
    norm = (g - mean) * lax.rsqrt(var + 1e-5)
    return jnp.maximum(norm * gamma + beta, 0.0)


# ----------------------------------------------------------------------------
if __name__ == "__main__":
    B, J, CIN, COUT = 2, 16, 32, 64
    GROUP_SIZE = 4                          # ctor arg, unused by the forward
    assert J % GROUP_SIZE == 0

    # Deterministic adjacency: self loops + ring.
    adj_np = np.eye(J, dtype=np.float32)
    for i in range(J):
        adj_np[i, (i + 1) % J] = 1.0
        adj_np[(i + 1) % J, i] = 1.0

    # grouped / restored orders: ctor args of _Simple_GraphConv, not used in forward.
    rng = np.random.RandomState(0)
    grouped_order = rng.permutation(J)
    restored_order = np.argsort(grouped_order)

    key = jax.random.PRNGKey(0)
    kx, kp = jax.random.split(key)
    x = jax.random.normal(kx, (B, J, CIN), jnp.float32)
    params = init_params(kp, adj_np, CIN, COUT)

    # Force full-f32 matmuls in both the Pallas kernel and the XLA reference.
    with jax.default_matmul_precision("float32"):
        out = jax.block_until_ready(simple_graph_conv(x, params))
        ref = jax.block_until_ready(
            ref_simple_graph_conv(x, params["adj_soft"], params["W0"], params["W1"],
                                  params["bias"], params["bn_gamma"], params["bn_beta"]))

    assert out.shape == (B, J, COUT) and out.dtype == jnp.float32
    max_err = float(jnp.max(jnp.abs(out - ref)))
    assert max_err < 5e-3, f"Pallas vs reference mismatch: {max_err}"
    print("KERNEL_OK")
</pallas_src>

<mosaic_0001>
module attributes {stable_mosaic.version = 11 : i64} {
  func.func @_simple_graphconv_kernel(%arg0: memref<2x16x32xf32, #tpu.memory_space<vmem>>, %arg1: memref<64x64xf32, #tpu.memory_space<vmem>>, %arg2: memref<16x16xf32, #tpu.memory_space<vmem>>, %arg3: memref<16x1xf32, #tpu.memory_space<vmem>>, %arg4: memref<2x64xf32, #tpu.memory_space<vmem>>, %arg5: memref<32x64xf32, #tpu.memory_space<vmem>>) attributes {dimension_semantics = [], scalar_prefetch = 0 : i64, scratch_operands = 0 : i64, tpu.core_type = #tpu.core_type<tc>} {
    %c0 = arith.constant 0 : index
    %c0_0 = arith.constant 0 : index
    %c0_1 = arith.constant 0 : index
    %0 = vector.load %arg0[%c0, %c0_0, %c0_1] : memref<2x16x32xf32, #tpu.memory_space<vmem>>, vector<2x16x32xf32>
    %c0_2 = arith.constant 0 : index
    %c0_3 = arith.constant 0 : index
    %1 = vector.load %arg2[%c0_2, %c0_3] : memref<16x16xf32, #tpu.memory_space<vmem>>, vector<16x16xf32>
    %2 = vector.shape_cast %1 : vector<16x16xf32> to vector<1x16x16xf32>
    %3 = vector.broadcast %2 : vector<1x16x16xf32> to vector<2x16x16xf32>
    "tpu.trace_start"() <{level = 10 : i32, message = "bjk,bkc->bjc"}> : () -> ()
    %cst = arith.constant dense<0.000000e+00> : vector<2x16x32xf32>
    %4 = tpu.matmul %3, %0, %cst {dimension_numbers = #tpu.dot_dimension_numbers<[2], [1], [1], [2], [0, 0, 0, 1, 1, 2], [0], [0]>, precision = #tpu.contract_precision<fp32>} : vector<2x16x16xf32>, vector<2x16x32xf32>, vector<2x16x32xf32> -> vector<2x16x32xf32>
    "tpu.trace_stop"() : () -> ()
    %c0_4 = arith.constant 0 : index
    %c0_5 = arith.constant 0 : index
    %5 = vector.load %arg3[%c0_4, %c0_5] : memref<16x1xf32, #tpu.memory_space<vmem>>, vector<16x1xf32>
    %6 = vector.shape_cast %5 : vector<16x1xf32> to vector<1x16x1xf32>
    %7 = vector.broadcast %6 : vector<1x16x1xf32> to vector<2x16x32xf32>
    %8 = arith.mulf %7, %0 : vector<2x16x32xf32>
    %9 = tpu.concatenate %8, %4 in 2 : vector<2x16x32xf32>, vector<2x16x32xf32> -> vector<2x16x64xf32>
    %10 = vector.shape_cast %9 : vector<2x16x64xf32> to vector<32x64xf32>
    %c0_6 = arith.constant 0 : index
    %c0_7 = arith.constant 0 : index
    %11 = vector.load %arg1[%c0_6, %c0_7] : memref<64x64xf32, #tpu.memory_space<vmem>>, vector<64x64xf32>
    %cst_8 = arith.constant dense<0.000000e+00> : vector<32x64xf32>
    %12 = tpu.matmul %10, %11, %cst_8 {dimension_numbers = #tpu.dot_dimension_numbers<[1], [0], [0], [1], [0, 0, 1, 1], [], []>, precision = #tpu.contract_precision<fp32>} : vector<32x64xf32>, vector<64x64xf32>, vector<32x64xf32> -> vector<32x64xf32>
    %c0_9 = arith.constant 0 : index
    %c0_10 = arith.constant 0 : index
    %13 = vector.load %arg4[%c0_9, %c0_10] : memref<2x64xf32, #tpu.memory_space<vmem>>, vector<2x64xf32>
    %cst_11 = arith.constant dense<0.000000e+00> : vector<64xf32>
    %14 = vector.multi_reduction <add>, %12, %cst_11 [0] : vector<32x64xf32> to vector<64xf32>
    %15 = vector.shape_cast %14 : vector<64xf32> to vector<1x64xf32>
    %cst_12 = arith.constant 3.200000e+01 : f32
    %16 = vector.broadcast %cst_12 : f32 to vector<1x64xf32>
    %17 = arith.divf %15, %16 : vector<1x64xf32>
    %18 = vector.broadcast %17 : vector<1x64xf32> to vector<32x64xf32>
    %19 = arith.subf %12, %18 : vector<32x64xf32>
    %20 = arith.mulf %19, %19 : vector<32x64xf32>
    %cst_13 = arith.constant dense<0.000000e+00> : vector<64xf32>
    %21 = vector.multi_reduction <add>, %20, %cst_13 [0] : vector<32x64xf32> to vector<64xf32>
    %22 = vector.shape_cast %21 : vector<64xf32> to vector<1x64xf32>
    %cst_14 = arith.constant 3.200000e+01 : f32
    %23 = vector.broadcast %cst_14 : f32 to vector<1x64xf32>
    %24 = arith.divf %22, %23 : vector<1x64xf32>
    %25 = vector.broadcast %17 : vector<1x64xf32> to vector<32x64xf32>
    %26 = arith.subf %12, %25 : vector<32x64xf32>
    %cst_15 = arith.constant 9.99999974E-6 : f32
    %27 = vector.broadcast %cst_15 : f32 to vector<1x64xf32>
    %28 = arith.addf %24, %27 : vector<1x64xf32>
    %29 = math.rsqrt %28 : vector<1x64xf32>
    %30 = vector.broadcast %29 : vector<1x64xf32> to vector<32x64xf32>
    %31 = arith.mulf %26, %30 : vector<32x64xf32>
    %32 = vector.extract_strided_slice %13 {offsets = [0, 0], sizes = [1, 64], strides = [1, 1]} : vector<2x64xf32> to vector<1x64xf32>
    %33 = vector.broadcast %32 : vector<1x64xf32> to vector<32x64xf32>
    %34 = arith.mulf %31, %33 : vector<32x64xf32>
    %35 = vector.extract_strided_slice %13 {offsets = [1, 0], sizes = [1, 64], strides = [1, 1]} : vector<2x64xf32> to vector<1x64xf32>
    %36 = vector.broadcast %35 : vector<1x64xf32> to vector<32x64xf32>
    %37 = arith.addf %34, %36 : vector<32x64xf32>
    %cst_16 = arith.constant 0.000000e+00 : f32
    %38 = vector.broadcast %cst_16 : f32 to vector<32x64xf32>
    %39 = arith.maximumf %37, %38 : vector<32x64xf32>
    %c0_17 = arith.constant 0 : index
    %c0_18 = arith.constant 0 : index
    %40 = vector.load %arg5[%c0_17, %c0_18] : memref<32x64xf32, #tpu.memory_space<vmem>>, vector<32x64xf32>
    tpu.vector_store %arg5[%c0_17, %c0_18], %39 {strides = array<i32>} : memref<32x64xf32, #tpu.memory_space<vmem>>, vector<32x64xf32>,
    return
  }
}

</mosaic_0001>

<llo_original>
// kernel: tpu_custom_call.1
$region0: #{tpu_custom_call.1}
  #allocation0 [shape = 'u32[]', space=smem, size = 0x4, offset = 0x4, fixed_abs, tag = 'smem constant byte address 0x4 - core index']
  #allocation1 [shape = 'u32[144,128]{1,0:T(1,128)}', space=vmem, size = 0x12000, scoped, tag = 'internal scratch']
  %s0 = inlined_call_operand.hbm [shape: f32[2,16,32], index: 0, kind: input, shape index: {}]
  %s1 = inlined_call_operand.hbm [shape: f32[64,64], index: 1, kind: input, shape index: {}]
  %s2 = inlined_call_operand.vmem [shape: f32[16,16], index: 2, kind: input, shape index: {}]
  %s3 = inlined_call_operand.vmem [shape: f32[16,1], index: 3, kind: input, shape index: {}]
  %s4 = inlined_call_operand.vmem [shape: f32[2,64], index: 4, kind: input, shape index: {}]
  %s5 = inlined_call_operand.hbm [shape: f32[32,64], index: 5, kind: output, shape index: {}]
  %s6 = sld [smem:[#allocation0]]
  $region38: #{tpu_custom_call.1} parent=0
    _
  %s8 = ssub.s32 1, %s6
  %s9 = scalar_select 0, %s8, %s6
  $region1: #{tpu_custom_call.1} parent=0
    #allocation2 [shape = 'u8[16384]{0}', space=vmem, size = 0x4000, scoped, tag = 'input window, operand 0, single buffered']
    #allocation3 [shape = 's32[1]{0}', space=sflag, size = 0x4, scoped, tag = 'scoped memory for tpu_custom_call.1']
    #allocation4 [shape = 's32[1]{0}', space=sflag, size = 0x4, scoped, tag = 'scoped memory for tpu_custom_call.1']
    #allocation5 [shape = 'u8[32768]{0}', space=vmem, size = 0x8000, scoped, tag = 'input window, operand 1, single buffered']
    #allocation6 [shape = 's32[1]{0}', space=sflag, size = 0x4, scoped, tag = 'scoped memory for tpu_custom_call.1']
    #allocation7 [shape = 'u8[16384]{0}', space=vmem, size = 0x4000, scoped, tag = 'output window, operand 0, single buffered']
    %10 = vsyncpa [#allocation3], 0
    %11 = vsyncpa [#allocation6], 0
    %12 = vsyncpa [#allocation4], 0
    // Predicated region
    $region2: #{tpu_custom_call.1} parent=1 // pred_check
      _
    $region3: #{tpu_custom_call.1} parent=1 // pred_check_branch
      %14 = sbr.rel (0) target = $region5
    $region4: #{tpu_custom_call.1} parent=1 // pred_region
      %s16 = ssub.s32 512, 512
      %17 = vsyncadd [#allocation3], %s16
      %s18 = sshll.u32 [#allocation2], 4
      %s19 = int_to_ptr.vmem [resolvable:$true] %s18
      %24 = dma.hbm_to_vmem [thread:$0]  %s0, 512, %s19, [#allocation3], 128, 128, 8
    $region5: #{tpu_custom_call.1} parent=1 // pred_fallthru
      _
    // Predicated region
    $region6: #{tpu_custom_call.1} parent=1 // pred_check
      _
    $region7: #{tpu_custom_call.1} parent=1 // pred_check_branch
      %26 = sbr.rel (0) target = $region9
    $region8: #{tpu_custom_call.1} parent=1 // pred_region
      %s28 = ssub.s32 1024, 1024
      %29 = vsyncadd [#allocation6], %s28
      %s30 = sshll.u32 [#allocation5], 4
      %s31 = int_to_ptr.vmem [resolvable:$true] %s30
      %36 = dma.hbm_to_vmem [thread:$0]  %s1, 1024, %s31, [#allocation6], 128, 128, 8
    $region9: #{tpu_custom_call.1} parent=1 // pred_fallthru
      _
    // Predicated region
    $region10: #{tpu_custom_call.1} parent=1 // pred_check
      _
    $region11: #{tpu_custom_call.1} parent=1 // pred_check_branch
      %38 = sbr.rel (0) target = $region13
    $region12: #{tpu_custom_call.1} parent=1 // pred_region
      _
    $region13: #{tpu_custom_call.1} parent=1 // pred_fallthru
      _
    // Predicated region
    $region14: #{tpu_custom_call.1} parent=1 // pred_check
      _
    $region15: #{tpu_custom_call.1} parent=1 // pred_check_branch
      %40 = sbr.rel (0) target = $region17
    $region16: #{tpu_custom_call.1} parent=1 // pred_region
      _
    $region17: #{tpu_custom_call.1} parent=1 // pred_fallthru
      _
    // Predicated region
    $region18: #{tpu_custom_call.1} parent=1 // pred_check
      _
    $region19: #{tpu_custom_call.1} parent=1 // pred_check_branch
      %42 = sbr.rel (0) target = $region21
    $region20: #{tpu_custom_call.1} parent=1 // pred_region
      _
    $region21: #{tpu_custom_call.1} parent=1 // pred_fallthru
      _
    // Predicated region
    $region22: #{tpu_custom_call.1} parent=1 // pred_check
      _
    $region23: #{tpu_custom_call.1} parent=1 // pred_check_branch
      %44 = sbr.rel (0) target = $region25
    $region24: #{tpu_custom_call.1} parent=1 // pred_region
      %45 = dma.done [#allocation3], 512
    $region25: #{tpu_custom_call.1} parent=1 // pred_fallthru
      _
    // Predicated region
    $region26: #{tpu_custom_call.1} parent=1 // pred_check
      _
    $region27: #{tpu_custom_call.1} parent=1 // pred_check_branch
      %47 = sbr.rel (0) target = $region29
    $region28: #{tpu_custom_call.1} parent=1 // pred_region
      %48 = dma.done [#allocation6], 1024
    $region29: #{tpu_custom_call.1} parent=1 // pred_fallthru
      _
    %v49 = vld [vmem:[#allocation2] sm:$0xff]
    %v50 = vld [vmem:[#allocation2 + $0x8] sm:$0xff]
    %v51 = vld [vmem:[#allocation2 + $0x10] sm:$0xff]
    %v52 = vld [vmem:[#allocation2 + $0x18] sm:$0xff]
    %v53 = vld [vmem:[%s2] sm:$0xff]
    %v54 = vld [vmem:[%s2 + $0x8] sm:$0xff]
    %vm55 = vcmask 130048
    %v57 = vsel %vm55, %v53, 0
    %v60 = vsel %vm55, %v54, 0
    %62 = vmatprep.subr.mxu0 0.0
    %63 = vmatpush1.msra.mxu0 0.0
    %64 = vmatprep.subr.mxu0 0.0
    %65 = vmatpush1.msra.mxu0 0.0
    %66 = vmatprep.subr.mxu0 0.0
    %67 = vmatpush1.msra.mxu0 0.0
    %68 = vmatprep.subr.mxu0 0.0
    %69 = vmatpush1.msra.mxu0 0.0
    %70 = vmatprep.subr.mxu0 0.0
    %71 = vmatpush1.msra.mxu0 0.0
    %72 = vmatprep.subr.mxu0 0.0
    %73 = vmatpush1.msra.mxu0 0.0
    %74 = vmatprep.subr.mxu0 0.0
    %75 = vmatpush1.msra.mxu0 0.0
    %76 = vmatprep.subr.mxu0 0.0
    %77 = vmatpush1.msra.mxu0 0.0
    %78 = vmatprep.subr.mxu0 0.0
    %79 = vmatpush1.msra.mxu0 0.0
    %80 = vmatprep.subr.mxu0 0.0
    %81 = vmatpush1.msra.mxu0 0.0
    %82 = vmatprep.subr.mxu0 0.0
    %83 = vmatpush1.msra.mxu0 0.0
    %84 = vmatprep.subr.mxu0 0.0
    %85 = vmatpush1.msra.mxu0 0.0
    %86 = vmatprep.subr.mxu0 0.0
    %87 = vmatpush1.msra.mxu0 0.0
    %88 = vmatprep.subr.mxu0 0.0
    %89 = vmatpush1.msra.mxu0 0.0
    %90 = vmatprep.subr.mxu0 0.0
    %v91 = vand.u32 %v50, 4294901760
    %92 = vmatpush1.msra.mxu0 %v91
    %93 = vmatprep.subr.mxu0 0.0
    %v94 = vand.u32 %v49, 4294901760
    %95 = vmatpush1.msra.mxu0 %v94
    %96 = vmatprep.subr.mxu0 0.0
    %97 = vmatpush2.msra.mxu0 0.0
    %98 = vmatprep.subr.mxu0 0.0
    %99 = vmatpush2.msra.mxu0 0.0
    %100 = vmatprep.subr.mxu0 0.0
    %101 = vmatpush2.msra.mxu0 0.0
    %102 = vmatprep.subr.mxu0 0.0
    %103 = vmatpush2.msra.mxu0 0.0
    %104 = vmatprep.subr.mxu0 0.0
    %105 = vmatpush2.msra.mxu0 0.0
    %106 = vmatprep.subr.mxu0 0.0
    %107 = vmatpush2.msra.mxu0 0.0
    %108 = vmatprep.subr.mxu0 0.0
    %109 = vmatpush2.msra.mxu0 0.0
    %110 = vmatprep.subr.mxu0 0.0
    %111 = vmatpush2.msra.mxu0 0.0
    %112 = vmatprep.subr.mxu0 0.0
    %113 = vmatpush2.msra.mxu0 0.0
    %114 = vmatprep.subr.mxu0 0.0
    %115 = vmatpush2.msra.mxu0 0.0
    %116 = vmatprep.subr.mxu0 0.0
    %117 = vmatpush2.msra.mxu0 0.0
    %118 = vmatprep.subr.mxu0 0.0
    %119 = vmatpush2.msra.mxu0 0.0
    %120 = vmatprep.subr.mxu0 0.0
    %121 = vmatpush2.msra.mxu0 0.0
    %122 = vmatprep.subr.mxu0 0.0
    %123 = vmatpush2.msra.mxu0 0.0
    %124 = vmatprep.subr.mxu0 0.0
    %125 = vmatpush2.msra.mxu0 0.0
    %126 = vmatprep.subr.mxu0 0.0
    %127 = vmatpush2.msra.mxu0 0.0
    %128 = vmatprep.mubr.f32.mxu0 0.0
    %v129 = vand.u32 %v57, 4294901760
    %v130 = vsub.f32 %v57, %v129
    %v131 = vand.u32 %v130, 4294901760
    %v132 = vsub.f32 %v130, %v131
    %v133 = vand.u32 %v132, 4294901760
    %134 = vmatmul.mubr.f32.gmra.mxu0 %v133
    %v135 = vpop.f32.mrf.mxu0
    %v136 = vadd.f32 0.0, %v135
    %v137 = vpop.f32.mrf.mxu0
    %138 = vmatprep.mubr.f32.mxu0 0.0
    %v139 = vand.u32 %v60, 4294901760
    %v140 = vsub.f32 %v60, %v139
    %v141 = vand.u32 %v140, 4294901760
    %v142 = vsub.f32 %v140, %v141
    %v143 = vand.u32 %v142, 4294901760
    %144 = vmatmul.mubr.f32.gmra.mxu0 %v143
    %v145 = vpop.f32.mrf.mxu0
    %v146 = vadd.f32 0.0, %v145
    %v147 = vpop.f32.mrf.mxu0
    %148 = vdwg.mxu0
    %149 = vmatprep.subr.mxu0 0.0
    %150 = vmatpush1.msra.mxu0 0.0
    %151 = vmatprep.subr.mxu0 0.0
    %152 = vmatpush1.msra.mxu0 0.0
    %153 = vmatprep.subr.mxu0 0.0
    %154 = vmatpush1.msra.mxu0 0.0
    %155 = vmatprep.subr.mxu0 0.0
    %156 = vmatpush1.msra.mxu0 0.0
    %157 = vmatprep.subr.mxu0 0.0
    %158 = vmatpush1.msra.mxu0 0.0
    %159 = vmatprep.subr.mxu0 0.0
    %160 = vmatpush1.msra.mxu0 0.0
    %161 = vmatprep.subr.mxu0 0.0
    %162 = vmatpush1.msra.mxu0 0.0
    %163 = vmatprep.subr.mxu0 0.0
    %164 = vmatpush1.msra.mxu0 0.0
    %165 = vmatprep.subr.mxu0 0.0
    %166 = vmatpush1.msra.mxu0 0.0
    %167 = vmatprep.subr.mxu0 0.0
    %168 = vmatpush1.msra.mxu0 0.0
    %169 = vmatprep.subr.mxu0 0.0
    %170 = vmatpush1.msra.mxu0 0.0
    %171 = vmatprep.subr.mxu0 0.0
    %172 = vmatpush1.msra.mxu0 0.0
    %173 = vmatprep.subr.mxu0 0.0
    %174 = vmatpush1.msra.mxu0 0.0
    %175 = vmatprep.subr.mxu0 0.0
    %176 = vmatpush1.msra.mxu0 0.0
    %177 = vmatprep.subr.mxu0 0.0
    %v178 = vand.u32 %v50, 4294901760
    %v179 = vsub.f32 %v50, %v178
    %v180 = vand.u32 %v179, 4294901760
    %v181 = vsub.f32 %v179, %v180
    %v182 = vand.u32 %v181, 4294901760
    %183 = vmatpush1.msra.mxu0 %v182
    %184 = vmatprep.subr.mxu0 0.0
    %v185 = vand.u32 %v49, 4294901760
    %v186 = vsub.f32 %v49, %v185
    %v187 = vand.u32 %v186, 4294901760
    %v188 = vsub.f32 %v186, %v187
    %v189 = vand.u32 %v188, 4294901760
    %190 = vmatpush1.msra.mxu0 %v189
    %191 = vmatprep.subr.mxu0 0.0
    %192 = vmatpush2.msra.mxu0 0.0
    %193 = vmatprep.subr.mxu0 0.0
    %194 = vmatpush2.msra.mxu0 0.0
    %195 = vmatprep.subr.mxu0 0.0
    %196 = vmatpush2.msra.mxu0 0.0
    %197 = vmatprep.subr.mxu0 0.0
    %198 = vmatpush2.msra.mxu0 0.0
    %199 = vmatprep.subr.mxu0 0.0
    %200 = vmatpush2.msra.mxu0 0.0
    %201 = vmatprep.subr.mxu0 0.0
    %202 = vmatpush2.msra.mxu0 0.0
    %203 = vmatprep.subr.mxu0 0.0
    %204 = vmatpush2.msra.mxu0 0.0
    %205 = vmatprep.subr.mxu0 0.0
    %206 = vmatpush2.msra.mxu0 0.0
    %207 = vmatprep.subr.mxu0 0.0
    %208 = vmatpush2.msra.mxu0 0.0
    %209 = vmatprep.subr.mxu0 0.0
    %210 = vmatpush2.msra.mxu0 0.0
    %211 = vmatprep.subr.mxu0 0.0
    %212 = vmatpush2.msra.mxu0 0.0
    %213 = vmatprep.subr.mxu0 0.0
    %214 = vmatpush2.msra.mxu0 0.0
    %215 = vmatprep.subr.mxu0 0.0
    %216 = vmatpush2.msra.mxu0 0.0
    %217 = vmatprep.subr.mxu0 0.0
    %218 = vmatpush2.msra.mxu0 0.0
    %219 = vmatprep.subr.mxu0 0.0
    %220 = vmatpush2.msra.mxu0 0.0
    %221 = vmatprep.subr.mxu0 0.0
    %222 = vmatpush2.msra.mxu0 0.0
    %223 = vmatprep.mubr.f32.mxu0 0.0
    %v224 = vand.u32 %v57, 4294901760
    %225 = vmatmul.mubr.f32.gmra.mxu0 %v224
    %v226 = vpop.f32.mrf.mxu0
    %v227 = vadd.f32 %v136, %v226
    %v228 = vpop.f32.mrf.mxu0
    %229 = vmatprep.mubr.f32.mxu0 0.0
    %v230 = vand.u32 %v60, 4294901760
    %231 = vmatmul.mubr.f32.gmra.mxu0 %v230
    %v232 = vpop.f32.mrf.mxu0
    %v233 = vadd.f32 %v146, %v232
    %v234 = vpop.f32.mrf.mxu0
    %235 = vdwg.mxu0
    %236 = vmatprep.subr.mxu0 0.0
    %237 = vmatpush1.msra.mxu0 0.0
    %238 = vmatprep.subr.mxu0 0.0
    %239 = vmatpush1.msra.mxu0 0.0
    %240 = vmatprep.subr.mxu0 0.0
    %241 = vmatpush1.msra.mxu0 0.0
    %242 = vmatprep.subr.mxu0 0.0
    %243 = vmatpush1.msra.mxu0 0.0
    %244 = vmatprep.subr.mxu0 0.0
    %245 = vmatpush1.msra.mxu0 0.0
    %246 = vmatprep.subr.mxu0 0.0
    %247 = vmatpush1.msra.mxu0 0.0
    %248 = vmatprep.subr.mxu0 0.0
    %249 = vmatpush1.msra.mxu0 0.0
    %250 = vmatprep.subr.mxu0 0.0
    %251 = vmatpush1.msra.mxu0 0.0
    %252 = vmatprep.subr.mxu0 0.0
    %253 = vmatpush1.msra.mxu0 0.0
    %254 = vmatprep.subr.mxu0 0.0
    %255 = vmatpush1.msra.mxu0 0.0
    %256 = vmatprep.subr.mxu0 0.0
    %257 = vmatpush1.msra.mxu0 0.0
    %258 = vmatprep.subr.mxu0 0.0
    %259 = vmatpush1.msra.mxu0 0.0
    %260 = vmatprep.subr.mxu0 0.0
    %261 = vmatpush1.msra.mxu0 0.0
    %262 = vmatprep.subr.mxu0 0.0
    %263 = vmatpush1.msra.mxu0 0.0
    %264 = vmatprep.subr.mxu0 0.0
    %v265 = vand.u32 %v50, 4294901760
    %v266 = vsub.f32 %v50, %v265
    %267 = vmatpush1.msra.mxu0 %v266
    %268 = vmatprep.subr.mxu0 0.0
    %v269 = vand.u32 %v49, 4294901760
    %v270 = vsub.f32 %v49, %v269
    %271 = vmatpush1.msra.mxu0 %v270
    %272 = vmatprep.subr.mxu0 0.0
    %273 = vmatpush2.msra.mxu0 0.0
    %274 = vmatprep.subr.mxu0 0.0
    %275 = vmatpush2.msra.mxu0 0.0
    %276 = vmatprep.subr.mxu0 0.0
    %277 = vmatpush2.msra.mxu0 0.0
    %278 = vmatprep.subr.mxu0 0.0
    %279 = vmatpush2.msra.mxu0 0.0
    %280 = vmatprep.subr.mxu0 0.0
    %281 = vmatpush2.msra.mxu0 0.0
    %282 = vmatprep.subr.mxu0 0.0
    %283 = vmatpush2.msra.mxu0 0.0
    %284 = vmatprep.subr.mxu0 0.0
    %285 = vmatpush2.msra.mxu0 0.0
    %286 = vmatprep.subr.mxu0 0.0
    %287 = vmatpush2.msra.mxu0 0.0
    %288 = vmatprep.subr.mxu0 0.0
    %289 = vmatpush2.msra.mxu0 0.0
    %290 = vmatprep.subr.mxu0 0.0
    %291 = vmatpush2.msra.mxu0 0.0
    %292 = vmatprep.subr.mxu0 0.0
    %293 = vmatpush2.msra.mxu0 0.0
    %294 = vmatprep.subr.mxu0 0.0
    %295 = vmatpush2.msra.mxu0 0.0
    %296 = vmatprep.subr.mxu0 0.0
    %297 = vmatpush2.msra.mxu0 0.0
    %298 = vmatprep.subr.mxu0 0.0
    %299 = vmatpush2.msra.mxu0 0.0
    %300 = vmatprep.subr.mxu0 0.0
    %301 = vmatpush2.msra.mxu0 0.0
    %302 = vmatprep.subr.mxu0 0.0
    %303 = vmatpush2.msra.mxu0 0.0
    %304 = vmatprep.mubr.f32.mxu0 0.0
    %v305 = vand.u32 %v57, 4294901760
    %v306 = vsub.f32 %v57, %v305
    %307 = vmatmul.mubr.f32.gmra.mxu0 %v306
    %v308 = vpop.f32.mrf.mxu0
    %v309 = vadd.f32 %v227, %v308
    %v310 = vpop.f32.mrf.mxu0
    %311 = vmatprep.mubr.f32.mxu0 0.0
    %v312 = vand.u32 %v60, 4294901760
    %v313 = vsub.f32 %v60, %v312
    %314 = vmatmul.mubr.f32.gmra.mxu0 %v313
    %v315 = vpop.f32.mrf.mxu0
    %v316 = vadd.f32 %v233, %v315
    %v317 = vpop.f32.mrf.mxu0
    %318 = vdwg.mxu0
    %319 = vmatprep.subr.mxu0 0.0
    %320 = vmatpush1.msra.mxu0 0.0
    %321 = vmatprep.subr.mxu0 0.0
    %322 = vmatpush1.msra.mxu0 0.0
    %323 = vmatprep.subr.mxu0 0.0
    %324 = vmatpush1.msra.mxu0 0.0
    %325 = vmatprep.subr.mxu0 0.0
    %326 = vmatpush1.msra.mxu0 0.0
    %327 = vmatprep.subr.mxu0 0.0
    %328 = vmatpush1.msra.mxu0 0.0
    %329 = vmatprep.subr.mxu0 0.0
    %330 = vmatpush1.msra.mxu0 0.0
    %331 = vmatprep.subr.mxu0 0.0
    %332 = vmatpush1.msra.mxu0 0.0
    %333 = vmatprep.subr.mxu0 0.0
    %334 = vmatpush1.msra.mxu0 0.0
    %335 = vmatprep.subr.mxu0 0.0
    %336 = vmatpush1.msra.mxu0 0.0
    %337 = vmatprep.subr.mxu0 0.0
    %338 = vmatpush1.msra.mxu0 0.0
    %339 = vmatprep.subr.mxu0 0.0
    %340 = vmatpush1.msra.mxu0 0.0
    %341 = vmatprep.subr.mxu0 0.0
    %342 = vmatpush1.msra.mxu0 0.0
    %343 = vmatprep.subr.mxu0 0.0
    %344 = vmatpush1.msra.mxu0 0.0
    %345 = vmatprep.subr.mxu0 0.0
    %346 = vmatpush1.msra.mxu0 0.0
    %347 = vmatprep.subr.mxu0 0.0
    %v348 = vand.u32 %v50, 4294901760
    %349 = vmatpush1.msra.mxu0 %v348
    %350 = vmatprep.subr.mxu0 0.0
    %v351 = vand.u32 %v49, 4294901760
    %352 = vmatpush1.msra.mxu0 %v351
    %353 = vmatprep.subr.mxu0 0.0
    %354 = vmatpush2.msra.mxu0 0.0
    %355 = vmatprep.subr.mxu0 0.0
    %356 = vmatpush2.msra.mxu0 0.0
    %357 = vmatprep.subr.mxu0 0.0
    %358 = vmatpush2.msra.mxu0 0.0
    %359 = vmatprep.subr.mxu0 0.0
    %360 = vmatpush2.msra.mxu0 0.0
    %361 = vmatprep.subr.mxu0 0.0
    %362 = vmatpush2.msra.mxu0 0.0
    %363 = vmatprep.subr.mxu0 0.0
    %364 = vmatpush2.msra.mxu0 0.0
    %365 = vmatprep.subr.mxu0 0.0
    %366 = vmatpush2.msra.mxu0 0.0
    %367 = vmatprep.subr.mxu0 0.0
    %368 = vmatpush2.msra.mxu0 0.0
    %369 = vmatprep.subr.mxu0 0.0
    %370 = vmatpush2.msra.mxu0 0.0
    %371 = vmatprep.subr.mxu0 0.0
    %372 = vmatpush2.msra.mxu0 0.0
    %373 = vmatprep.subr.mxu0 0.0
    %374 = vmatpush2.msra.mxu0 0.0
    %375 = vmatprep.subr.mxu0 0.0
    %376 = vmatpush2.msra.mxu0 0.0
    %377 = vmatprep.subr.mxu0 0.0
    %378 = vmatpush2.msra.mxu0 0.0
    %379 = vmatprep.subr.mxu0 0.0
    %380 = vmatpush2.msra.mxu0 0.0
    %381 = vmatprep.subr.mxu0 0.0
    %382 = vmatpush2.msra.mxu0 0.0
    %383 = vmatprep.subr.mxu0 0.0
    %384 = vmatpush2.msra.mxu0 0.0
    %385 = vmatprep.mubr.f32.mxu0 0.0
    %v386 = vand.u32 %v57, 4294901760
    %v387 = vsub.f32 %v57, %v386
    %v388 = vand.u32 %v387, 4294901760
    %389 = vmatmul.mubr.f32.gmra.mxu0 %v388
    %v390 = vpop.f32.mrf.mxu0
    %v391 = vadd.f32 %v309, %v390
    %v392 = vpop.f32.mrf.mxu0
    %393 = vmatprep.mubr.f32.mxu0 0.0
    %v394 = vand.u32 %v60, 4294901760
    %v395 = vsub.f32 %v60, %v394
    %v396 = vand.u32 %v395, 4294901760
    %397 = vmatmul.mubr.f32.gmra.mxu0 %v396
    %v398 = vpop.f32.mrf.mxu0
    %v399 = vadd.f32 %v316, %v398
    %v400 = vpop.f32.mrf.mxu0
    %401 = vdwg.mxu0
    %402 = vmatprep.subr.mxu0 0.0
    %403 = vmatpush1.msra.mxu0 0.0
    %404 = vmatprep.subr.mxu0 0.0
    %405 = vmatpush1.msra.mxu0 0.0
    %406 = vmatprep.subr.mxu0 0.0
    %407 = vmatpush1.msra.mxu0 0.0
    %408 = vmatprep.subr.mxu0 0.0
    %409 = vmatpush1.msra.mxu0 0.0
    %410 = vmatprep.subr.mxu0 0.0
    %411 = vmatpush1.msra.mxu0 0.0
    %412 = vmatprep.subr.mxu0 0.0
    %413 = vmatpush1.msra.mxu0 0.0
    %414 = vmatprep.subr.mxu0 0.0
    %415 = vmatpush1.msra.mxu0 0.0
    %416 = vmatprep.subr.mxu0 0.0
    %417 = vmatpush1.msra.mxu0 0.0
    %418 = vmatprep.subr.mxu0 0.0
    %419 = vmatpush1.msra.mxu0 0.0
    %420 = vmatprep.subr.mxu0 0.0
    %421 = vmatpush1.msra.mxu0 0.0
    %422 = vmatprep.subr.mxu0 0.0
    %423 = vmatpush1.msra.mxu0 0.0
    %424 = vmatprep.subr.mxu0 0.0
    %425 = vmatpush1.msra.mxu0 0.0
    %426 = vmatprep.subr.mxu0 0.0
    %427 = vmatpush1.msra.mxu0 0.0
    %428 = vmatprep.subr.mxu0 0.0
    %429 = vmatpush1.msra.mxu0 0.0
    %430 = vmatprep.subr.mxu0 0.0
    %v431 = vand.u32 %v50, 4294901760
    %v432 = vsub.f32 %v50, %v431
    %v433 = vand.u32 %v432, 4294901760
    %434 = vmatpush1.msra.mxu0 %v433
    %435 = vmatprep.subr.mxu0 0.0
    %v436 = vand.u32 %v49, 4294901760
    %v437 = vsub.f32 %v49, %v436
    %v438 = vand.u32 %v437, 4294901760
    %439 = vmatpush1.msra.mxu0 %v438
    %440 = vmatprep.subr.mxu0 0.0
    %441 = vmatpush2.msra.mxu0 0.0
    %442 = vmatprep.subr.mxu0 0.0
    %443 = vmatpush2.msra.mxu0 0.0
    %444 = vmatprep.subr.mxu0 0.0
    %445 = vmatpush2.msra.mxu0 0.0
    %446 = vmatprep.subr.mxu0 0.0
    %447 = vmatpush2.msra.mxu0 0.0
    %448 = vmatprep.subr.mxu0 0.0
    %449 = vmatpush2.msra.mxu0 0.0
    %450 = vmatprep.subr.mxu0 0.0
    %451 = vmatpush2.msra.mxu0 0.0
    %452 = vmatprep.subr.mxu0 0.0
    %453 = vmatpush2.msra.mxu0 0.0
    %454 = vmatprep.subr.mxu0 0.0
    %455 = vmatpush2.msra.mxu0 0.0
    %456 = vmatprep.subr.mxu0 0.0
    %457 = vmatpush2.msra.mxu0 0.0
    %458 = vmatprep.subr.mxu0 0.0
    %459 = vmatpush2.msra.mxu0 0.0
    %460 = vmatprep.subr.mxu0 0.0
    %461 = vmatpush2.msra.mxu0 0.0
    %462 = vmatprep.subr.mxu0 0.0
    %463 = vmatpush2.msra.mxu0 0.0
    %464 = vmatprep.subr.mxu0 0.0
    %465 = vmatpush2.msra.mxu0 0.0
    %466 = vmatprep.subr.mxu0 0.0
    %467 = vmatpush2.msra.mxu0 0.0
    %468 = vmatprep.subr.mxu0 0.0
    %469 = vmatpush2.msra.mxu0 0.0
    %470 = vmatprep.subr.mxu0 0.0
    %471 = vmatpush2.msra.mxu0 0.0
    %472 = vmatprep.mubr.f32.mxu0 0.0
    %v473 = vand.u32 %v57, 4294901760
    %474 = vmatmul.mubr.f32.gmra.mxu0 %v473
    %v475 = vpop.f32.mrf.mxu0
    %v476 = vadd.f32 %v391, %v475
    %v477 = vpop.f32.mrf.mxu0
    %478 = vmatprep.mubr.f32.mxu0 0.0
    %v479 = vand.u32 %v60, 4294901760
    %480 = vmatmul.mubr.f32.gmra.mxu0 %v479
    %v481 = vpop.f32.mrf.mxu0
    %v482 = vadd.f32 %v399, %v481
    %v483 = vpop.f32.mrf.mxu0
    %484 = vdwg.mxu0
    %485 = vmatprep.subr.mxu0 0.0
    %486 = vmatpush1.msra.mxu0 0.0
    %487 = vmatprep.subr.mxu0 0.0
    %488 = vmatpush1.msra.mxu0 0.0
    %489 = vmatprep.subr.mxu0 0.0
    %490 = vmatpush1.msra.mxu0 0.0
    %491 = vmatprep.subr.mxu0 0.0
    %492 = vmatpush1.msra.mxu0 0.0
    %493 = vmatprep.subr.mxu0 0.0
    %494 = vmatpush1.msra.mxu0 0.0
    %495 = vmatprep.subr.mxu0 0.0
    %496 = vmatpush1.msra.mxu0 0.0
    %497 = vmatprep.subr.mxu0 0.0
    %498 = vmatpush1.msra.mxu0 0.0
    %499 = vmatprep.subr.mxu0 0.0
    %500 = vmatpush1.msra.mxu0 0.0
    %501 = vmatprep.subr.mxu0 0.0
    %502 = vmatpush1.msra.mxu0 0.0
    %503 = vmatprep.subr.mxu0 0.0
    %504 = vmatpush1.msra.mxu0 0.0
    %505 = vmatprep.subr.mxu0 0.0
    %506 = vmatpush1.msra.mxu0 0.0
    %507 = vmatprep.subr.mxu0 0.0
    %508 = vmatpush1.msra.mxu0 0.0
    %509 = vmatprep.subr.mxu0 0.0
    %510 = vmatpush1.msra.mxu0 0.0
    %511 = vmatprep.subr.mxu0 0.0
    %512 = vmatpush1.msra.mxu0 0.0
    %513 = vmatprep.subr.mxu0 0.0
    %v514 = vand.u32 %v50, 4294901760
    %515 = vmatpush1.msra.mxu0 %v514
    %516 = vmatprep.subr.mxu0 0.0
    %v517 = vand.u32 %v49, 4294901760
    %518 = vmatpush1.msra.mxu0 %v517
    %519 = vmatprep.subr.mxu0 0.0
    %520 = vmatpush2.msra.mxu0 0.0
    %521 = vmatprep.subr.mxu0 0.0
    %522 = vmatpush2.msra.mxu0 0.0
    %523 = vmatprep.subr.mxu0 0.0
    %524 = vmatpush2.msra.mxu0 0.0
    %525 = vmatprep.subr.mxu0 0.0
    %526 = vmatpush2.msra.mxu0 0.0
    %527 = vmatprep.subr.mxu0 0.0
    %528 = vmatpush2.msra.mxu0 0.0
    %529 = vmatprep.subr.mxu0 0.0
    %530 = vmatpush2.msra.mxu0 0.0
    %531 = vmatprep.subr.mxu0 0.0
    %532 = vmatpush2.msra.mxu0 0.0
    %533 = vmatprep.subr.mxu0 0.0
    %534 = vmatpush2.msra.mxu0 0.0
    %535 = vmatprep.subr.mxu0 0.0
    %536 = vmatpush2.msra.mxu0 0.0
    %537 = vmatprep.subr.mxu0 0.0
    %538 = vmatpush2.msra.mxu0 0.0
    %539 = vmatprep.subr.mxu0 0.0
    %540 = vmatpush2.msra.mxu0 0.0
    %541 = vmatprep.subr.mxu0 0.0
    %542 = vmatpush2.msra.mxu0 0.0
    %543 = vmatprep.subr.mxu0 0.0
    %544 = vmatpush2.msra.mxu0 0.0
    %545 = vmatprep.subr.mxu0 0.0
    %546 = vmatpush2.msra.mxu0 0.0
    %547 = vmatprep.subr.mxu0 0.0
    %548 = vmatpush2.msra.mxu0 0.0
    %549 = vmatprep.subr.mxu0 0.0
    %550 = vmatpush2.msra.mxu0 0.0
    %551 = vmatprep.mubr.f32.mxu0 0.0
    %v552 = vand.u32 %v57, 4294901760
    %553 = vmatmul.mubr.f32.gmra.mxu0 %v552
    %v554 = vpop.f32.mrf.mxu0
    %v555 = vadd.f32 %v476, %v554
    %v556 = vpop.f32.mrf.mxu0
    %557 = vmatprep.mubr.f32.mxu0 0.0
    %v558 = vand.u32 %v60, 4294901760
    %559 = vmatmul.mubr.f32.gmra.mxu0 %v558
    %v560 = vpop.f32.mrf.mxu0
    %v561 = vadd.f32 %v482, %v560
    %v562 = vpop.f32.mrf.mxu0
    %563 = vdwg.mxu0
    %564 = vmatprep.subr.mxu0 0.0
    %565 = vmatpush1.msra.mxu0 0.0
    %566 = vmatprep.subr.mxu0 0.0
    %567 = vmatpush1.msra.mxu0 0.0
    %568 = vmatprep.subr.mxu0 0.0
    %569 = vmatpush1.msra.mxu0 0.0
    %570 = vmatprep.subr.mxu0 0.0
    %571 = vmatpush1.msra.mxu0 0.0
    %572 = vmatprep.subr.mxu0 0.0
    %573 = vmatpush1.msra.mxu0 0.0
    %574 = vmatprep.subr.mxu0 0.0
    %575 = vmatpush1.msra.mxu0 0.0
    %576 = vmatprep.subr.mxu0 0.0
    %577 = vmatpush1.msra.mxu0 0.0
    %578 = vmatprep.subr.mxu0 0.0
    %579 = vmatpush1.msra.mxu0 0.0
    %580 = vmatprep.subr.mxu0 0.0
    %581 = vmatpush1.msra.mxu0 0.0
    %582 = vmatprep.subr.mxu0 0.0
    %583 = vmatpush1.msra.mxu0 0.0
    %584 = vmatprep.subr.mxu0 0.0
    %585 = vmatpush1.msra.mxu0 0.0
    %586 = vmatprep.subr.mxu0 0.0
    %587 = vmatpush1.msra.mxu0 0.0
    %588 = vmatprep.subr.mxu0 0.0
    %589 = vmatpush1.msra.mxu0 0.0
    %590 = vmatprep.subr.mxu0 0.0
    %591 = vmatpush1.msra.mxu0 0.0
    %592 = vmatprep.subr.mxu0 0.0
    %v593 = vand.u32 %v52, 4294901760
    %594 = vmatpush1.msra.mxu0 %v593
    %595 = vmatprep.subr.mxu0 0.0
    %v596 = vand.u32 %v51, 4294901760
    %597 = vmatpush1.msra.mxu0 %v596
    %598 = vmatprep.subr.mxu0 0.0
    %599 = vmatpush2.msra.mxu0 0.0
    %600 = vmatprep.subr.mxu0 0.0
    %601 = vmatpush2.msra.mxu0 0.0
    %602 = vmatprep.subr.mxu0 0.0
    %603 = vmatpush2.msra.mxu0 0.0
    %604 = vmatprep.subr.mxu0 0.0
    %605 = vmatpush2.msra.mxu0 0.0
    %606 = vmatprep.subr.mxu0 0.0
    %607 = vmatpush2.msra.mxu0 0.0
    %608 = vmatprep.subr.mxu0 0.0
    %609 = vmatpush2.msra.mxu0 0.0
    %610 = vmatprep.subr.mxu0 0.0
    %611 = vmatpush2.msra.mxu0 0.0
    %612 = vmatprep.subr.mxu0 0.0
    %613 = vmatpush2.msra.mxu0 0.0
    %614 = vmatprep.subr.mxu0 0.0
    %615 = vmatpush2.msra.mxu0 0.0
    %616 = vmatprep.subr.mxu0 0.0
    %617 = vmatpush2.msra.mxu0 0.0
    %618 = vmatprep.subr.mxu0 0.0
    %619 = vmatpush2.msra.mxu0 0.0
    %620 = vmatprep.subr.mxu0 0.0
    %621 = vmatpush2.msra.mxu0 0.0
    %622 = vmatprep.subr.mxu0 0.0
    %623 = vmatpush2.msra.mxu0 0.0
    %624 = vmatprep.subr.mxu0 0.0
    %625 = vmatpush2.msra.mxu0 0.0
    %626 = vmatprep.subr.mxu0 0.0
    %627 = vmatpush2.msra.mxu0 0.0
    %628 = vmatprep.subr.mxu0 0.0
    %629 = vmatpush2.msra.mxu0 0.0
    %630 = vmatprep.mubr.f32.mxu0 0.0
    %v631 = vand.u32 %v57, 4294901760
    %v632 = vsub.f32 %v57, %v631
    %v633 = vand.u32 %v632, 4294901760
    %v634 = vsub.f32 %v632, %v633
    %v635 = vand.u32 %v634, 4294901760
    %636 = vmatmul.mubr.f32.gmra.mxu0 %v635
    %v637 = vpop.f32.mrf.mxu0
    %v638 = vadd.f32 0.0, %v637
    %v639 = vpop.f32.mrf.mxu0
    %640 = vmatprep.mubr.f32.mxu0 0.0
    %v641 = vand.u32 %v60, 4294901760
    %v642 = vsub.f32 %v60, %v641
    %v643 = vand.u32 %v642, 4294901760
    %v644 = vsub.f32 %v642, %v643
    %v645 = vand.u32 %v644, 4294901760
    %646 = vmatmul.mubr.f32.gmra.mxu0 %v645
    %v647 = vpop.f32.mrf.mxu0
    %v648 = vadd.f32 0.0, %v647
    %v649 = vpop.f32.mrf.mxu0
    %650 = vdwg.mxu0
    %651 = vmatprep.subr.mxu0 0.0
    %652 = vmatpush1.msra.mxu0 0.0
    %653 = vmatprep.subr.mxu0 0.0
    %654 = vmatpush1.msra.mxu0 0.0
    %655 = vmatprep.subr.mxu0 0.0
    %656 = vmatpush1.msra.mxu0 0.0
    %657 = vmatprep.subr.mxu0 0.0
    %658 = vmatpush1.msra.mxu0 0.0
    %659 = vmatprep.subr.mxu0 0.0
    %660 = vmatpush1.msra.mxu0 0.0
    %661 = vmatprep.subr.mxu0 0.0
    %662 = vmatpush1.msra.mxu0 0.0
    %663 = vmatprep.subr.mxu0 0.0
    %664 = vmatpush1.msra.mxu0 0.0
    %665 = vmatprep.subr.mxu0 0.0
    %666 = vmatpush1.msra.mxu0 0.0
    %667 = vmatprep.subr.mxu0 0.0
    %668 = vmatpush1.msra.mxu0 0.0
    %669 = vmatprep.subr.mxu0 0.0
    %670 = vmatpush1.msra.mxu0 0.0
    %671 = vmatprep.subr.mxu0 0.0
    %672 = vmatpush1.msra.mxu0 0.0
    %673 = vmatprep.subr.mxu0 0.0
    %674 = vmatpush1.msra.mxu0 0.0
    %675 = vmatprep.subr.mxu0 0.0
    %676 = vmatpush1.msra.mxu0 0.0
    %677 = vmatprep.subr.mxu0 0.0
    %678 = vmatpush1.msra.mxu0 0.0
    %679 = vmatprep.subr.mxu0 0.0
    %v680 = vand.u32 %v52, 4294901760
    %v681 = vsub.f32 %v52, %v680
    %v682 = vand.u32 %v681, 4294901760
    %v683 = vsub.f32 %v681, %v682
    %v684 = vand.u32 %v683, 4294901760
    %685 = vmatpush1.msra.mxu0 %v684
    %686 = vmatprep.subr.mxu0 0.0
    %v687 = vand.u32 %v51, 4294901760
    %v688 = vsub.f32 %v51, %v687
    %v689 = vand.u32 %v688, 4294901760
    %v690 = vsub.f32 %v688, %v689
    %v691 = vand.u32 %v690, 4294901760
    %692 = vmatpush1.msra.mxu0 %v691
    %693 = vmatprep.subr.mxu0 0.0
    %694 = vmatpush2.msra.mxu0 0.0
    %695 = vmatprep.subr.mxu0 0.0
    %696 = vmatpush2.msra.mxu0 0.0
    %697 = vmatprep.subr.mxu0 0.0
    %698 = vmatpush2.msra.mxu0 0.0
    %699 = vmatprep.subr.mxu0 0.0
    %700 = vmatpush2.msra.mxu0 0.0
    %701 = vmatprep.subr.mxu0 0.0
    %702 = vmatpush2.msra.mxu0 0.0
    %703 = vmatprep.subr.mxu0 0.0
    %704 = vmatpush2.msra.mxu0 0.0
    %705 = vmatprep.subr.mxu0 0.0
    %706 = vmatpush2.msra.mxu0 0.0
    %707 = vmatprep.subr.mxu0 0.0
    %708 = vmatpush2.msra.mxu0 0.0
    %709 = vmatprep.subr.mxu0 0.0
    %710 = vmatpush2.msra.mxu0 0.0
    %711 = vmatprep.subr.mxu0 0.0
    %712 = vmatpush2.msra.mxu0 0.0
    %713 = vmatprep.subr.mxu0 0.0
    %714 = vmatpush2.msra.mxu0 0.0
    %715 = vmatprep.subr.mxu0 0.0
    %716 = vmatpush2.msra.mxu0 0.0
    %717 = vmatprep.subr.mxu0 0.0
    %718 = vmatpush2.msra.mxu0 0.0
    %719 = vmatprep.subr.mxu0 0.0
    %720 = vmatpush2.msra.mxu0 0.0
    %721 = vmatprep.subr.mxu0 0.0
    %722 = vmatpush2.msra.mxu0 0.0
    %723 = vmatprep.subr.mxu0 0.0
    %724 = vmatpush2.msra.mxu0 0.0
    %725 = vmatprep.mubr.f32.mxu0 0.0
    %v726 = vand.u32 %v57, 4294901760
    %727 = vmatmul.mubr.f32.gmra.mxu0 %v726
    %v728 = vpop.f32.mrf.mxu0
    %v729 = vadd.f32 %v638, %v728
    %v730 = vpop.f32.mrf.mxu0
    %731 = vmatprep.mubr.f32.mxu0 0.0
    %v732 = vand.u32 %v60, 4294901760
    %733 = vmatmul.mubr.f32.gmra.mxu0 %v732
    %v734 = vpop.f32.mrf.mxu0
    %v735 = vadd.f32 %v648, %v734
    %v736 = vpop.f32.mrf.mxu0
    %737 = vdwg.mxu0
    %738 = vmatprep.subr.mxu0 0.0
    %739 = vmatpush1.msra.mxu0 0.0
    %740 = vmatprep.subr.mxu0 0.0
    %741 = vmatpush1.msra.mxu0 0.0
    %742 = vmatprep.subr.mxu0 0.0
    %743 = vmatpush1.msra.mxu0 0.0
    %744 = vmatprep.subr.mxu0 0.0
    %745 = vmatpush1.msra.mxu0 0.0
    %746 = vmatprep.subr.mxu0 0.0
    %747 = vmatpush1.msra.mxu0 0.0
    %748 = vmatprep.subr.mxu0 0.0
    %749 = vmatpush1.msra.mxu0 0.0
    %750 = vmatprep.subr.mxu0 0.0
    %751 = vmatpush1.msra.mxu0 0.0
    %752 = vmatprep.subr.mxu0 0.0
    %753 = vmatpush1.msra.mxu0 0.0
    %754 = vmatprep.subr.mxu0 0.0
    %755 = vmatpush1.msra.mxu0 0.0
    %756 = vmatprep.subr.mxu0 0.0
    %757 = vmatpush1.msra.mxu0 0.0
    %758 = vmatprep.subr.mxu0 0.0
    %759 = vmatpush1.msra.mxu0 0.0
    %760 = vmatprep.subr.mxu0 0.0
    %761 = vmatpush1.msra.mxu0 0.0
    %762 = vmatprep.subr.mxu0 0.0
    %763 = vmatpush1.msra.mxu0 0.0
    %764 = vmatprep.subr.mxu0 0.0
    %765 = vmatpush1.msra.mxu0 0.0
    %766 = vmatprep.subr.mxu0 0.0
    %v767 = vand.u32 %v52, 4294901760
    %v768 = vsub.f32 %v52, %v767
    %769 = vmatpush1.msra.mxu0 %v768
    %770 = vmatprep.subr.mxu0 0.0
    %v771 = vand.u32 %v51, 4294901760
    %v772 = vsub.f32 %v51, %v771
    %773 = vmatpush1.msra.mxu0 %v772
    %774 = vmatprep.subr.mxu0 0.0
    %775 = vmatpush2.msra.mxu0 0.0
    %776 = vmatprep.subr.mxu0 0.0
    %777 = vmatpush2.msra.mxu0 0.0
    %778 = vmatprep.subr.mxu0 0.0
    %779 = vmatpush2.msra.mxu0 0.0
    %780 = vmatprep.subr.mxu0 0.0
    %781 = vmatpush2.msra.mxu0 0.0
    %782 = vmatprep.subr.mxu0 0.0
    %783 = vmatpush2.msra.mxu0 0.0
    %784 = vmatprep.subr.mxu0 0.0
    %785 = vmatpush2.msra.mxu0 0.0
    %786 = vmatprep.subr.mxu0 0.0
    %787 = vmatpush2.msra.mxu0 0.0
    %788 = vmatprep.subr.mxu0 0.0
    %789 = vmatpush2.msra.mxu0 0.0
    %790 = vmatprep.subr.mxu0 0.0
    %791 = vmatpush2.msra.mxu0 0.0
    %792 = vmatprep.subr.mxu0 0.0
    %793 = vmatpush2.msra.mxu0 0.0
    %794 = vmatprep.subr.mxu0 0.0
    %795 = vmatpush2.msra.mxu0 0.0
    %796 = vmatprep.subr.mxu0 0.0
    %797 = vmatpush2.msra.mxu0 0.0
    %798 = vmatprep.subr.mxu0 0.0
    %799 = vmatpush2.msra.mxu0 0.0
    %800 = vmatprep.subr.mxu0 0.0
    %801 = vmatpush2.msra.mxu0 0.0
    %802 = vmatprep.subr.mxu0 0.0
    %803 = vmatpush2.msra.mxu0 0.0
    %804 = vmatprep.subr.mxu0 0.0
    %805 = vmatpush2.msra.mxu0 0.0
    %806 = vmatprep.mubr.f32.mxu0 0.0
    %v807 = vand.u32 %v57, 4294901760
    %v808 = vsub.f32 %v57, %v807
    %809 = vmatmul.mubr.f32.gmra.mxu0 %v808
    %v810 = vpop.f32.mrf.mxu0
    %v811 = vadd.f32 %v729, %v810
    %v812 = vpop.f32.mrf.mxu0
    %813 = vmatprep.mubr.f32.mxu0 0.0
    %v814 = vand.u32 %v60, 4294901760
    %v815 = vsub.f32 %v60, %v814
    %816 = vmatmul.mubr.f32.gmra.mxu0 %v815
    %v817 = vpop.f32.mrf.mxu0
    %v818 = vadd.f32 %v735, %v817
    %v819 = vpop.f32.mrf.mxu0
    %820 = vdwg.mxu0
    %821 = vmatprep.subr.mxu0 0.0
    %822 = vmatpush1.msra.mxu0 0.0
    %823 = vmatprep.subr.mxu0 0.0
    %824 = vmatpush1.msra.mxu0 0.0
    %825 = vmatprep.subr.mxu0 0.0
    %826 = vmatpush1.msra.mxu0 0.0
    %827 = vmatprep.subr.mxu0 0.0
    %828 = vmatpush1.msra.mxu0 0.0
    %829 = vmatprep.subr.mxu0 0.0
    %830 = vmatpush1.msra.mxu0 0.0
    %831 = vmatprep.subr.mxu0 0.0
    %832 = vmatpush1.msra.mxu0 0.0
    %833 = vmatprep.subr.mxu0 0.0
    %834 = vmatpush1.msra.mxu0 0.0
    %835 = vmatprep.subr.mxu0 0.0
    %836 = vmatpush1.msra.mxu0 0.0
    %837 = vmatprep.subr.mxu0 0.0
    %838 = vmatpush1.msra.mxu0 0.0
    %839 = vmatprep.subr.mxu0 0.0
    %840 = vmatpush1.msra.mxu0 0.0
    %841 = vmatprep.subr.mxu0 0.0
    %842 = vmatpush1.msra.mxu0 0.0
    %843 = vmatprep.subr.mxu0 0.0
    %844 = vmatpush1.msra.mxu0 0.0
    %845 = vmatprep.subr.mxu0 0.0
    %846 = vmatpush1.msra.mxu0 0.0
    %847 = vmatprep.subr.mxu0 0.0
    %848 = vmatpush1.msra.mxu0 0.0
    %849 = vmatprep.subr.mxu0 0.0
    %v850 = vand.u32 %v52, 4294901760
    %851 = vmatpush1.msra.mxu0 %v850
    %852 = vmatprep.subr.mxu0 0.0
    %v853 = vand.u32 %v51, 4294901760
    %854 = vmatpush1.msra.mxu0 %v853
    %855 = vmatprep.subr.mxu0 0.0
    %856 = vmatpush2.msra.mxu0 0.0
    %857 = vmatprep.subr.mxu0 0.0
    %858 = vmatpush2.msra.mxu0 0.0
    %859 = vmatprep.subr.mxu0 0.0
    %860 = vmatpush2.msra.mxu0 0.0
    %861 = vmatprep.subr.mxu0 0.0
    %862 = vmatpush2.msra.mxu0 0.0
    %863 = vmatprep.subr.mxu0 0.0
    %864 = vmatpush2.msra.mxu0 0.0
    %865 = vmatprep.subr.mxu0 0.0
    %866 = vmatpush2.msra.mxu0 0.0
    %867 = vmatprep.subr.mxu0 0.0
    %868 = vmatpush2.msra.mxu0 0.0
    %869 = vmatprep.subr.mxu0 0.0
    %870 = vmatpush2.msra.mxu0 0.0
    %871 = vmatprep.subr.mxu0 0.0
    %872 = vmatpush2.msra.mxu0 0.0
    %873 = vmatprep.subr.mxu0 0.0
    %874 = vmatpush2.msra.mxu0 0.0
    %875 = vmatprep.subr.mxu0 0.0
    %876 = vmatpush2.msra.mxu0 0.0
    %877 = vmatprep.subr.mxu0 0.0
    %878 = vmatpush2.msra.mxu0 0.0
    %879 = vmatprep.subr.mxu0 0.0
    %880 = vmatpush2.msra.mxu0 0.0
    %881 = vmatprep.subr.mxu0 0.0
    %882 = vmatpush2.msra.mxu0 0.0
    %883 = vmatprep.subr.mxu0 0.0
    %884 = vmatpush2.msra.mxu0 0.0
    %885 = vmatprep.subr.mxu0 0.0
    %886 = vmatpush2.msra.mxu0 0.0
    %887 = vmatprep.mubr.f32.mxu0 0.0
    %v888 = vand.u32 %v57, 4294901760
    %v889 = vsub.f32 %v57, %v888
    %v890 = vand.u32 %v889, 4294901760
    %891 = vmatmul.mubr.f32.gmra.mxu0 %v890
    %v892 = vpop.f32.mrf.mxu0
    %v893 = vadd.f32 %v811, %v892
    %v894 = vpop.f32.mrf.mxu0
    %895 = vmatprep.mubr.f32.mxu0 0.0
    %v896 = vand.u32 %v60, 4294901760
    %v897 = vsub.f32 %v60, %v896
    %v898 = vand.u32 %v897, 4294901760
    %899 = vmatmul.mubr.f32.gmra.mxu0 %v898
    %v900 = vpop.f32.mrf.mxu0
    %v901 = vadd.f32 %v818, %v900
    %v902 = vpop.f32.mrf.mxu0
    %903 = vdwg.mxu0
    %904 = vmatprep.subr.mxu0 0.0
    %905 = vmatpush1.msra.mxu0 0.0
    %906 = vmatprep.subr.mxu0 0.0
    %907 = vmatpush1.msra.mxu0 0.0
    %908 = vmatprep.subr.mxu0 0.0
    %909 = vmatpush1.msra.mxu0 0.0
    %910 = vmatprep.subr.mxu0 0.0
    %911 = vmatpush1.msra.mxu0 0.0
    %912 = vmatprep.subr.mxu0 0.0
    %913 = vmatpush1.msra.mxu0 0.0
    %914 = vmatprep.subr.mxu0 0.0
    %915 = vmatpush1.msra.mxu0 0.0
    %916 = vmatprep.subr.mxu0 0.0
    %917 = vmatpush1.msra.mxu0 0.0
    %918 = vmatprep.subr.mxu0 0.0
    %919 = vmatpush1.msra.mxu0 0.0
    %920 = vmatprep.subr.mxu0 0.0
    %921 = vmatpush1.msra.mxu0 0.0
    %922 = vmatprep.subr.mxu0 0.0
    %923 = vmatpush1.msra.mxu0 0.0
    %924 = vmatprep.subr.mxu0 0.0
    %925 = vmatpush1.msra.mxu0 0.0
    %926 = vmatprep.subr.mxu0 0.0
    %927 = vmatpush1.msra.mxu0 0.0
    %928 = vmatprep.subr.mxu0 0.0
    %929 = vmatpush1.msra.mxu0 0.0
    %930 = vmatprep.subr.mxu0 0.0
    %931 = vmatpush1.msra.mxu0 0.0
    %932 = vmatprep.subr.mxu0 0.0
    %v933 = vand.u32 %v52, 4294901760
    %v934 = vsub.f32 %v52, %v933
    %v935 = vand.u32 %v934, 4294901760
    %936 = vmatpush1.msra.mxu0 %v935
    %937 = vmatprep.subr.mxu0 0.0
    %v938 = vand.u32 %v51, 4294901760
    %v939 = vsub.f32 %v51, %v938
    %v940 = vand.u32 %v939, 4294901760
    %941 = vmatpush1.msra.mxu0 %v940
    %942 = vmatprep.subr.mxu0 0.0
    %943 = vmatpush2.msra.mxu0 0.0
    %944 = vmatprep.subr.mxu0 0.0
    %945 = vmatpush2.msra.mxu0 0.0
    %946 = vmatprep.subr.mxu0 0.0
    %947 = vmatpush2.msra.mxu0 0.0
    %948 = vmatprep.subr.mxu0 0.0
    %949 = vmatpush2.msra.mxu0 0.0
    %950 = vmatprep.subr.mxu0 0.0
    %951 = vmatpush2.msra.mxu0 0.0
    %952 = vmatprep.subr.mxu0 0.0
    %953 = vmatpush2.msra.mxu0 0.0
    %954 = vmatprep.subr.mxu0 0.0
    %955 = vmatpush2.msra.mxu0 0.0
    %956 = vmatprep.subr.mxu0 0.0
    %957 = vmatpush2.msra.mxu0 0.0
    %958 = vmatprep.subr.mxu0 0.0
    %959 = vmatpush2.msra.mxu0 0.0
    %960 = vmatprep.subr.mxu0 0.0
    %961 = vmatpush2.msra.mxu0 0.0
    %962 = vmatprep.subr.mxu0 0.0
    %963 = vmatpush2.msra.mxu0 0.0
    %964 = vmatprep.subr.mxu0 0.0
    %965 = vmatpush2.msra.mxu0 0.0
    %966 = vmatprep.subr.mxu0 0.0
    %967 = vmatpush2.msra.mxu0 0.0
    %968 = vmatprep.subr.mxu0 0.0
    %969 = vmatpush2.msra.mxu0 0.0
    %970 = vmatprep.subr.mxu0 0.0
    %971 = vmatpush2.msra.mxu0 0.0
    %972 = vmatprep.subr.mxu0 0.0
    %973 = vmatpush2.msra.mxu0 0.0
    %974 = vmatprep.mubr.f32.mxu0 0.0
    %v975 = vand.u32 %v57, 4294901760
    %976 = vmatmul.mubr.f32.gmra.mxu0 %v975
    %v977 = vpop.f32.mrf.mxu0
    %v978 = vadd.f32 %v893, %v977
    %v979 = vpop.f32.mrf.mxu0
    %980 = vmatprep.mubr.f32.mxu0 0.0
    %v981 = vand.u32 %v60, 4294901760
    %982 = vmatmul.mubr.f32.gmra.mxu0 %v981
    %v983 = vpop.f32.mrf.mxu0
    %v984 = vadd.f32 %v901, %v983
    %v985 = vpop.f32.mrf.mxu0
    %986 = vdwg.mxu0
    %987 = vmatprep.subr.mxu0 0.0
    %988 = vmatpush1.msra.mxu0 0.0
    %989 = vmatprep.subr.mxu0 0.0
    %990 = vmatpush1.msra.mxu0 0.0
    %991 = vmatprep.subr.mxu0 0.0
    %992 = vmatpush1.msra.mxu0 0.0
    %993 = vmatprep.subr.mxu0 0.0
    %994 = vmatpush1.msra.mxu0 0.0
    %995 = vmatprep.subr.mxu0 0.0
    %996 = vmatpush1.msra.mxu0 0.0
    %997 = vmatprep.subr.mxu0 0.0
    %998 = vmatpush1.msra.mxu0 0.0
    %999 = vmatprep.subr.mxu0 0.0
    %1000 = vmatpush1.msra.mxu0 0.0
    %1001 = vmatprep.subr.mxu0 0.0
    %1002 = vmatpush1.msra.mxu0 0.0
    %1003 = vmatprep.subr.mxu0 0.0
    %1004 = vmatpush1.msra.mxu0 0.0
    %1005 = vmatprep.subr.mxu0 0.0
    %1006 = vmatpush1.msra.mxu0 0.0
    %1007 = vmatprep.subr.mxu0 0.0
    %1008 = vmatpush1.msra.mxu0 0.0
    %1009 = vmatprep.subr.mxu0 0.0
    %1010 = vmatpush1.msra.mxu0 0.0
    %1011 = vmatprep.subr.mxu0 0.0
    %1012 = vmatpush1.msra.mxu0 0.0
    %1013 = vmatprep.subr.mxu0 0.0
    %1014 = vmatpush1.msra.mxu0 0.0
    %1015 = vmatprep.subr.mxu0 0.0
    %v1016 = vand.u32 %v52, 4294901760
    %1017 = vmatpush1.msra.mxu0 %v1016
    %1018 = vmatprep.subr.mxu0 0.0
    %v1019 = vand.u32 %v51, 4294901760
    %1020 = vmatpush1.msra.mxu0 %v1019
    %1021 = vmatprep.subr.mxu0 0.0
    %1022 = vmatpush2.msra.mxu0 0.0
    %1023 = vmatprep.subr.mxu0 0.0
    %1024 = vmatpush2.msra.mxu0 0.0
    %1025 = vmatprep.subr.mxu0 0.0
    %1026 = vmatpush2.msra.mxu0 0.0
    %1027 = vmatprep.subr.mxu0 0.0
    %1028 = vmatpush2.msra.mxu0 0.0
    %1029 = vmatprep.subr.mxu0 0.0
    %1030 = vmatpush2.msra.mxu0 0.0
    %1031 = vmatprep.subr.mxu0 0.0
    %1032 = vmatpush2.msra.mxu0 0.0
    %1033 = vmatprep.subr.mxu0 0.0
    %1034 = vmatpush2.msra.mxu0 0.0
    %1035 = vmatprep.subr.mxu0 0.0
    %1036 = vmatpush2.msra.mxu0 0.0
    %1037 = vmatprep.subr.mxu0 0.0
    %1038 = vmatpush2.msra.mxu0 0.0
    %1039 = vmatprep.subr.mxu0 0.0
    %1040 = vmatpush2.msra.mxu0 0.0
    %1041 = vmatprep.subr.mxu0 0.0
    %1042 = vmatpush2.msra.mxu0 0.0
    %1043 = vmatprep.subr.mxu0 0.0
    %1044 = vmatpush2.msra.mxu0 0.0
    %1045 = vmatprep.subr.mxu0 0.0
    %1046 = vmatpush2.msra.mxu0 0.0
    %1047 = vmatprep.subr.mxu0 0.0
    %1048 = vmatpush2.msra.mxu0 0.0
    %1049 = vmatprep.subr.mxu0 0.0
    %1050 = vmatpush2.msra.mxu0 0.0
    %1051 = vmatprep.subr.mxu0 0.0
    %1052 = vmatpush2.msra.mxu0 0.0
    %1053 = vmatprep.mubr.f32.mxu0 0.0
    %v1054 = vand.u32 %v57, 4294901760
    %1055 = vmatmul.mubr.f32.gmra.mxu0 %v1054
    %v1056 = vpop.f32.mrf.mxu0
    %v1057 = vadd.f32 %v978, %v1056
    %v1058 = vpop.f32.mrf.mxu0
    %1059 = vmatprep.mubr.f32.mxu0 0.0
    %v1060 = vand.u32 %v60, 4294901760
    %1061 = vmatmul.mubr.f32.gmra.mxu0 %v1060
    %v1062 = vpop.f32.mrf.mxu0
    %v1063 = vadd.f32 %v984, %v1062
    %v1064 = vpop.f32.mrf.mxu0
    %1065 = vdwg.mxu0
    %v1066 = vld [vmem:[%s3] sm:$0xff]
    %v1067 = vld [vmem:[%s3 + $0x8] sm:$0xff]
    %1069 = vset.pattern.permute.xlu0 0
    %1070 = vperm.xlu0 %1069, %v1066
    %v1071 = vpop.permute.xlu0 %1070
    %1074 = vset.pattern.permute.xlu0 0
    %1075 = vperm.xlu0 %1074, %v1067
    %v1076 = vpop.permute.xlu0 %1075
    %v1078 = vmul.f32 %v1071, %v49
    %v1079 = vmul.f32 %v1076, %v50
    %v1080 = vmul.f32 %v1071, %v51
    %v1081 = vmul.f32 %v1076, %v52
    %1086 = vrot.lane.b32.xlu0 %v555, 32
    %v1087 = vpop.permute.xlu0 %1086
    %1088 = vrot.lane.b32.xlu0 %v561, 32
    %v1089 = vpop.permute.xlu0 %1088
    %1090 = vrot.lane.b32.xlu0 %v1057, 32
    %v1091 = vpop.permute.xlu0 %1090
    %1092 = vrot.lane.b32.xlu0 %v1063, 32
    %v1093 = vpop.permute.xlu0 %1092
    %vm1098 = vcmask 261120
    %v1099 = vsel %vm1098, %v1078, %v1087
    %v1100 = vsel %vm1098, %v1079, %v1089
    %v1101 = vsel %vm1098, %v1080, %v1091
    %v1102 = vsel %vm1098, %v1081, %v1093
    %v1103 = vld [vmem:[#allocation5] sm:$0xff]
    %v1104 = vld [vmem:[#allocation5 + $0x8] sm:$0xff]
    %v1105 = vld [vmem:[#allocation5 + $0x10] sm:$0xff]
    %v1106 = vld [vmem:[#allocation5 + $0x18] sm:$0xff]
    %v1107 = vld [vmem:[#allocation5 + $0x20] sm:$0xff]
    %v1108 = vld [vmem:[#allocation5 + $0x28] sm:$0xff]
    %v1109 = vld [vmem:[#allocation5 + $0x30] sm:$0xff]
    %v1110 = vld [vmem:[#allocation5 + $0x38] sm:$0xff]
    %vm1111 = vcmask 523264
    %v1113 = vsel %vm1111, %v1099, 0
    %v1116 = vsel %vm1111, %v1100, 0
    %v1119 = vsel %vm1111, %v1101, 0
    %v1122 = vsel %vm1111, %v1102, 0
    %1124 = vmatprep.subr.mxu0 0.0
    %1125 = vmatpush1.msra.mxu0 0.0
    %1126 = vmatprep.subr.mxu0 0.0
    %1127 = vmatpush1.msra.mxu0 0.0
    %1128 = vmatprep.subr.mxu0 0.0
    %1129 = vmatpush1.msra.mxu0 0.0
    %1130 = vmatprep.subr.mxu0 0.0
    %1131 = vmatpush1.msra.mxu0 0.0
    %1132 = vmatprep.subr.mxu0 0.0
    %1133 = vmatpush1.msra.mxu0 0.0
    %1134 = vmatprep.subr.mxu0 0.0
    %1135 = vmatpush1.msra.mxu0 0.0
    %1136 = vmatprep.subr.mxu0 0.0
    %1137 = vmatpush1.msra.mxu0 0.0
    %1138 = vmatprep.subr.mxu0 0.0
    %1139 = vmatpush1.msra.mxu0 0.0
    %1140 = vmatprep.subr.mxu0 0.0
    %v1141 = vand.u32 %v1110, 4294901760
    %1142 = vmatpush1.msra.mxu0 %v1141
    %1143 = vmatprep.subr.mxu0 0.0
    %v1144 = vand.u32 %v1109, 4294901760
    %1145 = vmatpush1.msra.mxu0 %v1144
    %1146 = vmatprep.subr.mxu0 0.0
    %v1147 = vand.u32 %v1108, 4294901760
    %1148 = vmatpush1.msra.mxu0 %v1147
    %1149 = vmatprep.subr.mxu0 0.0
    %v1150 = vand.u32 %v1107, 4294901760
    %1151 = vmatpush1.msra.mxu0 %v1150
    %1152 = vmatprep.subr.mxu0 0.0
    %v1153 = vand.u32 %v1106, 4294901760
    %1154 = vmatpush1.msra.mxu0 %v1153
    %1155 = vmatprep.subr.mxu0 0.0
    %v1156 = vand.u32 %v1105, 4294901760
    %1157 = vmatpush1.msra.mxu0 %v1156
    %1158 = vmatprep.subr.mxu0 0.0
    %v1159 = vand.u32 %v1104, 4294901760
    %1160 = vmatpush1.msra.mxu0 %v1159
    %1161 = vmatprep.subr.mxu0 0.0
    %v1162 = vand.u32 %v1103, 4294901760
    %1163 = vmatpush1.msra.mxu0 %v1162
    %1164 = vmatprep.subr.mxu0 0.0
    %1165 = vmatpush2.msra.mxu0 0.0
    %1166 = vmatprep.subr.mxu0 0.0
    %1167 = vmatpush2.msra.mxu0 0.0
    %1168 = vmatprep.subr.mxu0 0.0
    %1169 = vmatpush2.msra.mxu0 0.0
    %1170 = vmatprep.subr.mxu0 0.0
    %1171 = vmatpush2.msra.mxu0 0.0
    %1172 = vmatprep.subr.mxu0 0.0
    %1173 = vmatpush2.msra.mxu0 0.0
    %1174 = vmatprep.subr.mxu0 0.0
    %1175 = vmatpush2.msra.mxu0 0.0
    %1176 = vmatprep.subr.mxu0 0.0
    %1177 = vmatpush2.msra.mxu0 0.0
    %1178 = vmatprep.subr.mxu0 0.0
    %1179 = vmatpush2.msra.mxu0 0.0
    %1180 = vmatprep.subr.mxu0 0.0
    %1181 = vmatpush2.msra.mxu0 0.0
    %1182 = vmatprep.subr.mxu0 0.0
    %1183 = vmatpush2.msra.mxu0 0.0
    %1184 = vmatprep.subr.mxu0 0.0
    %1185 = vmatpush2.msra.mxu0 0.0
    %1186 = vmatprep.subr.mxu0 0.0
    %1187 = vmatpush2.msra.mxu0 0.0
    %1188 = vmatprep.subr.mxu0 0.0
    %1189 = vmatpush2.msra.mxu0 0.0
    %1190 = vmatprep.subr.mxu0 0.0
    %1191 = vmatpush2.msra.mxu0 0.0
    %1192 = vmatprep.subr.mxu0 0.0
    %1193 = vmatpush2.msra.mxu0 0.0
    %1194 = vmatprep.subr.mxu0 0.0
    %1195 = vmatpush2.msra.mxu0 0.0
    %1196 = vmatprep.mubr.f32.mxu0 0.0
    %v1197 = vand.u32 %v1113, 4294901760
    %v1198 = vsub.f32 %v1113, %v1197
    %v1199 = vand.u32 %v1198, 4294901760
    %v1200 = vsub.f32 %v1198, %v1199
    %v1201 = vand.u32 %v1200, 4294901760
    %1202 = vmatmul.mubr.f32.gmra.mxu0 %v1201
    %v1203 = vpop.f32.mrf.mxu0
    %v1204 = vadd.f32 0.0, %v1203
    %v1205 = vpop.f32.mrf.mxu0
    %1206 = vmatprep.mubr.f32.mxu0 0.0
    %v1207 = vand.u32 %v1116, 4294901760
    %v1208 = vsub.f32 %v1116, %v1207
    %v1209 = vand.u32 %v1208, 4294901760
    %v1210 = vsub.f32 %v1208, %v1209
    %v1211 = vand.u32 %v1210, 4294901760
    %1212 = vmatmul.mubr.f32.gmra.mxu0 %v1211
    %v1213 = vpop.f32.mrf.mxu0
    %v1214 = vadd.f32 0.0, %v1213
    %v1215 = vpop.f32.mrf.mxu0
    %1216 = vmatprep.mubr.f32.mxu0 0.0
    %v1217 = vand.u32 %v1119, 4294901760
    %v1218 = vsub.f32 %v1119, %v1217
    %v1219 = vand.u32 %v1218, 4294901760
    %v1220 = vsub.f32 %v1218, %v1219
    %v1221 = vand.u32 %v1220, 4294901760
    %1222 = vmatmul.mubr.f32.gmra.mxu0 %v1221
    %v1223 = vpop.f32.mrf.mxu0
    %v1224 = vadd.f32 0.0, %v1223
    %v1225 = vpop.f32.mrf.mxu0
    %1226 = vmatprep.mubr.f32.mxu0 0.0
    %v1227 = vand.u32 %v1122, 4294901760
    %v1228 = vsub.f32 %v1122, %v1227
    %v1229 = vand.u32 %v1228, 4294901760
    %v1230 = vsub.f32 %v1228, %v1229
    %v1231 = vand.u32 %v1230, 4294901760
    %1232 = vmatmul.mubr.f32.gmra.mxu0 %v1231
    %v1233 = vpop.f32.mrf.mxu0
    %v1234 = vadd.f32 0.0, %v1233
    %v1235 = vpop.f32.mrf.mxu0
    %1236 = vdwg.mxu0
    %1237 = vmatprep.subr.mxu0 0.0
    %1238 = vmatpush1.msra.mxu0 0.0
    %1239 = vmatprep.subr.mxu0 0.0
    %1240 = vmatpush1.msra.mxu0 0.0
    %1241 = vmatprep.subr.mxu0 0.0
    %1242 = vmatpush1.msra.mxu0 0.0
    %1243 = vmatprep.subr.mxu0 0.0
    %1244 = vmatpush1.msra.mxu0 0.0
    %1245 = vmatprep.subr.mxu0 0.0
    %1246 = vmatpush1.msra.mxu0 0.0
    %1247 = vmatprep.subr.mxu0 0.0
    %1248 = vmatpush1.msra.mxu0 0.0
    %1249 = vmatprep.subr.mxu0 0.0
    %1250 = vmatpush1.msra.mxu0 0.0
    %1251 = vmatprep.subr.mxu0 0.0
    %1252 = vmatpush1.msra.mxu0 0.0
    %1253 = vmatprep.subr.mxu0 0.0
    %v1254 = vand.u32 %v1110, 4294901760
    %v1255 = vsub.f32 %v1110, %v1254
    %v1256 = vand.u32 %v1255, 4294901760
    %v1257 = vsub.f32 %v1255, %v1256
    %v1258 = vand.u32 %v1257, 4294901760
    %1259 = vmatpush1.msra.mxu0 %v1258
    %1260 = vmatprep.subr.mxu0 0.0
    %v1261 = vand.u32 %v1109, 4294901760
    %v1262 = vsub.f32 %v1109, %v1261
    %v1263 = vand.u32 %v1262, 4294901760
    %v1264 = vsub.f32 %v1262, %v1263
    %v1265 = vand.u32 %v1264, 4294901760
    %1266 = vmatpush1.msra.mxu0 %v1265
    %1267 = vmatprep.subr.mxu0 0.0
    %v1268 = vand.u32 %v1108, 4294901760
    %v1269 = vsub.f32 %v1108, %v1268
    %v1270 = vand.u32 %v1269, 4294901760
    %v1271 = vsub.f32 %v1269, %v1270
    %v1272 = vand.u32 %v1271, 4294901760
    %1273 = vmatpush1.msra.mxu0 %v1272
    %1274 = vmatprep.subr.mxu0 0.0
    %v1275 = vand.u32 %v1107, 4294901760
    %v1276 = vsub.f32 %v1107, %v1275
    %v1277 = vand.u32 %v1276, 4294901760
    %v1278 = vsub.f32 %v1276, %v1277
    %v1279 = vand.u32 %v1278, 4294901760
    %1280 = vmatpush1.msra.mxu0 %v1279
    %1281 = vmatprep.subr.mxu0 0.0
    %v1282 = vand.u32 %v1106, 4294901760
    %v1283 = vsub.f32 %v1106, %v1282
    %v1284 = vand.u32 %v1283, 4294901760
    %v1285 = vsub.f32 %v1283, %v1284
    %v1286 = vand.u32 %v1285, 4294901760
    %1287 = vmatpush1.msra.mxu0 %v1286
    %1288 = vmatprep.subr.mxu0 0.0
    %v1289 = vand.u32 %v1105, 4294901760
    %v1290 = vsub.f32 %v1105, %v1289
    %v1291 = vand.u32 %v1290, 4294901760
    %v1292 = vsub.f32 %v1290, %v1291
    %v1293 = vand.u32 %v1292, 4294901760
    %1294 = vmatpush1.msra.mxu0 %v1293
    %1295 = vmatprep.subr.mxu0 0.0
    %v1296 = vand.u32 %v1104, 4294901760
    %v1297 = vsub.f32 %v1104, %v1296
    %v1298 = vand.u32 %v1297, 4294901760
    %v1299 = vsub.f32 %v1297, %v1298
    %v1300 = vand.u32 %v1299, 4294901760
    %1301 = vmatpush1.msra.mxu0 %v1300
    %1302 = vmatprep.subr.mxu0 0.0
    %v1303 = vand.u32 %v1103, 4294901760
    %v1304 = vsub.f32 %v1103, %v1303
    %v1305 = vand.u32 %v1304, 4294901760
    %v1306 = vsub.f32 %v1304, %v1305
    %v1307 = vand.u32 %v1306, 4294901760
    %1308 = vmatpush1.msra.mxu0 %v1307
    %1309 = vmatprep.subr.mxu0 0.0
    %1310 = vmatpush2.msra.mxu0 0.0
    %1311 = vmatprep.subr.mxu0 0.0
    %1312 = vmatpush2.msra.mxu0 0.0
    %1313 = vmatprep.subr.mxu0 0.0
    %1314 = vmatpush2.msra.mxu0 0.0
    %1315 = vmatprep.subr.mxu0 0.0
    %1316 = vmatpush2.msra.mxu0 0.0
    %1317 = vmatprep.subr.mxu0 0.0
    %1318 = vmatpush2.msra.mxu0 0.0
    %1319 = vmatprep.subr.mxu0 0.0
    %1320 = vmatpush2.msra.mxu0 0.0
    %1321 = vmatprep.subr.mxu0 0.0
    %1322 = vmatpush2.msra.mxu0 0.0
    %1323 = vmatprep.subr.mxu0 0.0
    %1324 = vmatpush2.msra.mxu0 0.0
    %1325 = vmatprep.subr.mxu0 0.0
    %1326 = vmatpush2.msra.mxu0 0.0
    %1327 = vmatprep.subr.mxu0 0.0
    %1328 = vmatpush2.msra.mxu0 0.0
    %1329 = vmatprep.subr.mxu0 0.0
    %1330 = vmatpush2.msra.mxu0 0.0
    %1331 = vmatprep.subr.mxu0 0.0
    %1332 = vmatpush2.msra.mxu0 0.0
    %1333 = vmatprep.subr.mxu0 0.0
    %1334 = vmatpush2.msra.mxu0 0.0
    %1335 = vmatprep.subr.mxu0 0.0
    %1336 = vmatpush2.msra.mxu0 0.0
    %1337 = vmatprep.subr.mxu0 0.0
    %1338 = vmatpush2.msra.mxu0 0.0
    %1339 = vmatprep.subr.mxu0 0.0
    %1340 = vmatpush2.msra.mxu0 0.0
    %1341 = vmatprep.mubr.f32.mxu0 0.0
    %v1342 = vand.u32 %v1113, 4294901760
    %1343 = vmatmul.mubr.f32.gmra.mxu0 %v1342
    %v1344 = vpop.f32.mrf.mxu0
    %v1345 = vadd.f32 %v1204, %v1344
    %v1346 = vpop.f32.mrf.mxu0
    %1347 = vmatprep.mubr.f32.mxu0 0.0
    %v1348 = vand.u32 %v1116, 4294901760
    %1349 = vmatmul.mubr.f32.gmra.mxu0 %v1348
    %v1350 = vpop.f32.mrf.mxu0
    %v1351 = vadd.f32 %v1214, %v1350
    %v1352 = vpop.f32.mrf.mxu0
    %1353 = vmatprep.mubr.f32.mxu0 0.0
    %v1354 = vand.u32 %v1119, 4294901760
    %1355 = vmatmul.mubr.f32.gmra.mxu0 %v1354
    %v1356 = vpop.f32.mrf.mxu0
    %v1357 = vadd.f32 %v1224, %v1356
    %v1358 = vpop.f32.mrf.mxu0
    %1359 = vmatprep.mubr.f32.mxu0 0.0
    %v1360 = vand.u32 %v1122, 4294901760
    %1361 = vmatmul.mubr.f32.gmra.mxu0 %v1360
    %v1362 = vpop.f32.mrf.mxu0
    %v1363 = vadd.f32 %v1234, %v1362
    %v1364 = vpop.f32.mrf.mxu0
    %1365 = vdwg.mxu0
    %1366 = vmatprep.subr.mxu0 0.0
    %1367 = vmatpush1.msra.mxu0 0.0
    %1368 = vmatprep.subr.mxu0 0.0
    %1369 = vmatpush1.msra.mxu0 0.0
    %1370 = vmatprep.subr.mxu0 0.0
    %1371 = vmatpush1.msra.mxu0 0.0
    %1372 = vmatprep.subr.mxu0 0.0
    %1373 = vmatpush1.msra.mxu0 0.0
    %1374 = vmatprep.subr.mxu0 0.0
    %1375 = vmatpush1.msra.mxu0 0.0
    %1376 = vmatprep.subr.mxu0 0.0
    %1377 = vmatpush1.msra.mxu0 0.0
    %1378 = vmatprep.subr.mxu0 0.0
    %1379 = vmatpush1.msra.mxu0 0.0
    %1380 = vmatprep.subr.mxu0 0.0
    %1381 = vmatpush1.msra.mxu0 0.0
    %1382 = vmatprep.subr.mxu0 0.0
    %v1383 = vand.u32 %v1110, 4294901760
    %v1384 = vsub.f32 %v1110, %v1383
    %1385 = vmatpush1.msra.mxu0 %v1384
    %1386 = vmatprep.subr.mxu0 0.0
    %v1387 = vand.u32 %v1109, 4294901760
    %v1388 = vsub.f32 %v1109, %v1387
    %1389 = vmatpush1.msra.mxu0 %v1388
    %1390 = vmatprep.subr.mxu0 0.0
    %v1391 = vand.u32 %v1108, 4294901760
    %v1392 = vsub.f32 %v1108, %v1391
    %1393 = vmatpush1.msra.mxu0 %v1392
    %1394 = vmatprep.subr.mxu0 0.0
    %v1395 = vand.u32 %v1107, 4294901760
    %v1396 = vsub.f32 %v1107, %v1395
    %1397 = vmatpush1.msra.mxu0 %v1396
    %1398 = vmatprep.subr.mxu0 0.0
    %v1399 = vand.u32 %v1106, 4294901760
    %v1400 = vsub.f32 %v1106, %v1399
    %1401 = vmatpush1.msra.mxu0 %v1400
    %1402 = vmatprep.subr.mxu0 0.0
    %v1403 = vand.u32 %v1105, 4294901760
    %v1404 = vsub.f32 %v1105, %v1403
    %1405 = vmatpush1.msra.mxu0 %v1404
    %1406 = vmatprep.subr.mxu0 0.0
    %v1407 = vand.u32 %v1104, 4294901760
    %v1408 = vsub.f32 %v1104, %v1407
    %1409 = vmatpush1.msra.mxu0 %v1408
    %1410 = vmatprep.subr.mxu0 0.0
    %v1411 = vand.u32 %v1103, 4294901760
    %v1412 = vsub.f32 %v1103, %v1411
    %1413 = vmatpush1.msra.mxu0 %v1412
    %1414 = vmatprep.subr.mxu0 0.0
    %1415 = vmatpush2.msra.mxu0 0.0
    %1416 = vmatprep.subr.mxu0 0.0
    %1417 = vmatpush2.msra.mxu0 0.0
    %1418 = vmatprep.subr.mxu0 0.0
    %1419 = vmatpush2.msra.mxu0 0.0
    %1420 = vmatprep.subr.mxu0 0.0
    %1421 = vmatpush2.msra.mxu0 0.0
    %1422 = vmatprep.subr.mxu0 0.0
    %1423 = vmatpush2.msra.mxu0 0.0
    %1424 = vmatprep.subr.mxu0 0.0
    %1425 = vmatpush2.msra.mxu0 0.0
    %1426 = vmatprep.subr.mxu0 0.0
    %1427 = vmatpush2.msra.mxu0 0.0
    %1428 = vmatprep.subr.mxu0 0.0
    %1429 = vmatpush2.msra.mxu0 0.0
    %1430 = vmatprep.subr.mxu0 0.0
    %1431 = vmatpush2.msra.mxu0 0.0
    %1432 = vmatprep.subr.mxu0 0.0
    %1433 = vmatpush2.msra.mxu0 0.0
    %1434 = vmatprep.subr.mxu0 0.0
    %1435 = vmatpush2.msra.mxu0 0.0
    %1436 = vmatprep.subr.mxu0 0.0
    %1437 = vmatpush2.msra.mxu0 0.0
    %1438 = vmatprep.subr.mxu0 0.0
    %1439 = vmatpush2.msra.mxu0 0.0
    %1440 = vmatprep.subr.mxu0 0.0
    %1441 = vmatpush2.msra.mxu0 0.0
    %1442 = vmatprep.subr.mxu0 0.0
    %1443 = vmatpush2.msra.mxu0 0.0
    %1444 = vmatprep.subr.mxu0 0.0
    %1445 = vmatpush2.msra.mxu0 0.0
    %1446 = vmatprep.mubr.f32.mxu0 0.0
    %v1447 = vand.u32 %v1113, 4294901760
    %v1448 = vsub.f32 %v1113, %v1447
    %1449 = vmatmul.mubr.f32.gmra.mxu0 %v1448
    %v1450 = vpop.f32.mrf.mxu0
    %v1451 = vadd.f32 %v1345, %v1450
    %v1452 = vpop.f32.mrf.mxu0
    %1453 = vmatprep.mubr.f32.mxu0 0.0
    %v1454 = vand.u32 %v1116, 4294901760
    %v1455 = vsub.f32 %v1116, %v1454
    %1456 = vmatmul.mubr.f32.gmra.mxu0 %v1455
    %v1457 = vpop.f32.mrf.mxu0
    %v1458 = vadd.f32 %v1351, %v1457
    %v1459 = vpop.f32.mrf.mxu0
    %1460 = vmatprep.mubr.f32.mxu0 0.0
    %v1461 = vand.u32 %v1119, 4294901760
    %v1462 = vsub.f32 %v1119, %v1461
    %1463 = vmatmul.mubr.f32.gmra.mxu0 %v1462
    %v1464 = vpop.f32.mrf.mxu0
    %v1465 = vadd.f32 %v1357, %v1464
    %v1466 = vpop.f32.mrf.mxu0
    %1467 = vmatprep.mubr.f32.mxu0 0.0
    %v1468 = vand.u32 %v1122, 4294901760
    %v1469 = vsub.f32 %v1122, %v1468
    %1470 = vmatmul.mubr.f32.gmra.mxu0 %v1469
    %v1471 = vpop.f32.mrf.mxu0
    %v1472 = vadd.f32 %v1363, %v1471
    %v1473 = vpop.f32.mrf.mxu0
    %1474 = vdwg.mxu0
    %1475 = vmatprep.subr.mxu0 0.0
    %1476 = vmatpush1.msra.mxu0 0.0
    %1477 = vmatprep.subr.mxu0 0.0
    %1478 = vmatpush1.msra.mxu0 0.0
    %1479 = vmatprep.subr.mxu0 0.0
    %1480 = vmatpush1.msra.mxu0 0.0
    %1481 = vmatprep.subr.mxu0 0.0
    %1482 = vmatpush1.msra.mxu0 0.0
    %1483 = vmatprep.subr.mxu0 0.0
    %1484 = vmatpush1.msra.mxu0 0.0
    %1485 = vmatprep.subr.mxu0 0.0
    %1486 = vmatpush1.msra.mxu0 0.0
    %1487 = vmatprep.subr.mxu0 0.0
    %1488 = vmatpush1.msra.mxu0 0.0
    %1489 = vmatprep.subr.mxu0 0.0
    %1490 = vmatpush1.msra.mxu0 0.0
    %1491 = vmatprep.subr.mxu0 0.0
    %v1492 = vand.u32 %v1110, 4294901760
    %1493 = vmatpush1.msra.mxu0 %v1492
    %1494 = vmatprep.subr.mxu0 0.0
    %v1495 = vand.u32 %v1109, 4294901760
    %1496 = vmatpush1.msra.mxu0 %v1495
    %1497 = vmatprep.subr.mxu0 0.0
    %v1498 = vand.u32 %v1108, 4294901760
    %1499 = vmatpush1.msra.mxu0 %v1498
    %1500 = vmatprep.subr.mxu0 0.0
    %v1501 = vand.u32 %v1107, 4294901760
    %1502 = vmatpush1.msra.mxu0 %v1501
    %1503 = vmatprep.subr.mxu0 0.0
    %v1504 = vand.u32 %v1106, 4294901760
    %1505 = vmatpush1.msra.mxu0 %v1504
    %1506 = vmatprep.subr.mxu0 0.0
    %v1507 = vand.u32 %v1105, 4294901760
    %1508 = vmatpush1.msra.mxu0 %v1507
    %1509 = vmatprep.subr.mxu0 0.0
    %v1510 = vand.u32 %v1104, 4294901760
    %1511 = vmatpush1.msra.mxu0 %v1510
    %1512 = vmatprep.subr.mxu0 0.0
    %v1513 = vand.u32 %v1103, 4294901760
    %1514 = vmatpush1.msra.mxu0 %v1513
    %1515 = vmatprep.subr.mxu0 0.0
    %1516 = vmatpush2.msra.mxu0 0.0
    %1517 = vmatprep.subr.mxu0 0.0
    %1518 = vmatpush2.msra.mxu0 0.0
    %1519 = vmatprep.subr.mxu0 0.0
    %1520 = vmatpush2.msra.mxu0 0.0
    %1521 = vmatprep.subr.mxu0 0.0
    %1522 = vmatpush2.msra.mxu0 0.0
    %1523 = vmatprep.subr.mxu0 0.0
    %1524 = vmatpush2.msra.mxu0 0.0
    %1525 = vmatprep.subr.mxu0 0.0
    %1526 = vmatpush2.msra.mxu0 0.0
    %1527 = vmatprep.subr.mxu0 0.0
    %1528 = vmatpush2.msra.mxu0 0.0
    %1529 = vmatprep.subr.mxu0 0.0
    %1530 = vmatpush2.msra.mxu0 0.0
    %1531 = vmatprep.subr.mxu0 0.0
    %1532 = vmatpush2.msra.mxu0 0.0
    %1533 = vmatprep.subr.mxu0 0.0
    %1534 = vmatpush2.msra.mxu0 0.0
    %1535 = vmatprep.subr.mxu0 0.0
    %1536 = vmatpush2.msra.mxu0 0.0
    %1537 = vmatprep.subr.mxu0 0.0
    %1538 = vmatpush2.msra.mxu0 0.0
    %1539 = vmatprep.subr.mxu0 0.0
    %1540 = vmatpush2.msra.mxu0 0.0
    %1541 = vmatprep.subr.mxu0 0.0
    %1542 = vmatpush2.msra.mxu0 0.0
    %1543 = vmatprep.subr.mxu0 0.0
    %1544 = vmatpush2.msra.mxu0 0.0
    %1545 = vmatprep.subr.mxu0 0.0
    %1546 = vmatpush2.msra.mxu0 0.0
    %1547 = vmatprep.mubr.f32.mxu0 0.0
    %v1548 = vand.u32 %v1113, 4294901760
    %v1549 = vsub.f32 %v1113, %v1548
    %v1550 = vand.u32 %v1549, 4294901760
    %1551 = vmatmul.mubr.f32.gmra.mxu0 %v1550
    %v1552 = vpop.f32.mrf.mxu0
    %v1553 = vadd.f32 %v1451, %v1552
    %v1554 = vpop.f32.mrf.mxu0
    %1555 = vmatprep.mubr.f32.mxu0 0.0
    %v1556 = vand.u32 %v1116, 4294901760
    %v1557 = vsub.f32 %v1116, %v1556
    %v1558 = vand.u32 %v1557, 4294901760
    %1559 = vmatmul.mubr.f32.gmra.mxu0 %v1558
    %v1560 = vpop.f32.mrf.mxu0
    %v1561 = vadd.f32 %v1458, %v1560
    %v1562 = vpop.f32.mrf.mxu0
    %1563 = vmatprep.mubr.f32.mxu0 0.0
    %v1564 = vand.u32 %v1119, 4294901760
    %v1565 = vsub.f32 %v1119, %v1564
    %v1566 = vand.u32 %v1565, 4294901760
    %1567 = vmatmul.mubr.f32.gmra.mxu0 %v1566
    %v1568 = vpop.f32.mrf.mxu0
    %v1569 = vadd.f32 %v1465, %v1568
    %v1570 = vpop.f32.mrf.mxu0
    %1571 = vmatprep.mubr.f32.mxu0 0.0
    %v1572 = vand.u32 %v1122, 4294901760
    %v1573 = vsub.f32 %v1122, %v1572
    %v1574 = vand.u32 %v1573, 4294901760
    %1575 = vmatmul.mubr.f32.gmra.mxu0 %v1574
    %v1576 = vpop.f32.mrf.mxu0
    %v1577 = vadd.f32 %v1472, %v1576
    %v1578 = vpop.f32.mrf.mxu0
    %1579 = vdwg.mxu0
    %1580 = vmatprep.subr.mxu0 0.0
    %1581 = vmatpush1.msra.mxu0 0.0
    %1582 = vmatprep.subr.mxu0 0.0
    %1583 = vmatpush1.msra.mxu0 0.0
    %1584 = vmatprep.subr.mxu0 0.0
    %1585 = vmatpush1.msra.mxu0 0.0
    %1586 = vmatprep.subr.mxu0 0.0
    %1587 = vmatpush1.msra.mxu0 0.0
    %1588 = vmatprep.subr.mxu0 0.0
    %1589 = vmatpush1.msra.mxu0 0.0
    %1590 = vmatprep.subr.mxu0 0.0
    %1591 = vmatpush1.msra.mxu0 0.0
    %1592 = vmatprep.subr.mxu0 0.0
    %1593 = vmatpush1.msra.mxu0 0.0
    %1594 = vmatprep.subr.mxu0 0.0
    %1595 = vmatpush1.msra.mxu0 0.0
    %1596 = vmatprep.subr.mxu0 0.0
    %v1597 = vand.u32 %v1110, 4294901760
    %v1598 = vsub.f32 %v1110, %v1597
    %v1599 = vand.u32 %v1598, 4294901760
    %1600 = vmatpush1.msra.mxu0 %v1599
    %1601 = vmatprep.subr.mxu0 0.0
    %v1602 = vand.u32 %v1109, 4294901760
    %v1603 = vsub.f32 %v1109, %v1602
    %v1604 = vand.u32 %v1603, 4294901760
    %1605 = vmatpush1.msra.mxu0 %v1604
    %1606 = vmatprep.subr.mxu0 0.0
    %v1607 = vand.u32 %v1108, 4294901760
    %v1608 = vsub.f32 %v1108, %v1607
    %v1609 = vand.u32 %v1608, 4294901760
    %1610 = vmatpush1.msra.mxu0 %v1609
    %1611 = vmatprep.subr.mxu0 0.0
    %v1612 = vand.u32 %v1107, 4294901760
    %v1613 = vsub.f32 %v1107, %v1612
    %v1614 = vand.u32 %v1613, 4294901760
    %1615 = vmatpush1.msra.mxu0 %v1614
    %1616 = vmatprep.subr.mxu0 0.0
    %v1617 = vand.u32 %v1106, 4294901760
    %v1618 = vsub.f32 %v1106, %v1617
    %v1619 = vand.u32 %v1618, 4294901760
    %1620 = vmatpush1.msra.mxu0 %v1619
    %1621 = vmatprep.subr.mxu0 0.0
    %v1622 = vand.u32 %v1105, 4294901760
    %v1623 = vsub.f32 %v1105, %v1622
    %v1624 = vand.u32 %v1623, 4294901760
    %1625 = vmatpush1.msra.mxu0 %v1624
    %1626 = vmatprep.subr.mxu0 0.0
    %v1627 = vand.u32 %v1104, 4294901760
    %v1628 = vsub.f32 %v1104, %v1627
    %v1629 = vand.u32 %v1628, 4294901760
    %1630 = vmatpush1.msra.mxu0 %v1629
    %1631 = vmatprep.subr.mxu0 0.0
    %v1632 = vand.u32 %v1103, 4294901760
    %v1633 = vsub.f32 %v1103, %v1632
    %v1634 = vand.u32 %v1633, 4294901760
    %1635 = vmatpush1.msra.mxu0 %v1634
    %1636 = vmatprep.subr.mxu0 0.0
    %1637 = vmatpush2.msra.mxu0 0.0
    %1638 = vmatprep.subr.mxu0 0.0
    %1639 = vmatpush2.msra.mxu0 0.0
    %1640 = vmatprep.subr.mxu0 0.0
    %1641 = vmatpush2.msra.mxu0 0.0
    %1642 = vmatprep.subr.mxu0 0.0
    %1643 = vmatpush2.msra.mxu0 0.0
    %1644 = vmatprep.subr.mxu0 0.0
    %1645 = vmatpush2.msra.mxu0 0.0
    %1646 = vmatprep.subr.mxu0 0.0
    %1647 = vmatpush2.msra.mxu0 0.0
    %1648 = vmatprep.subr.mxu0 0.0
    %1649 = vmatpush2.msra.mxu0 0.0
    %1650 = vmatprep.subr.mxu0 0.0
    %1651 = vmatpush2.msra.mxu0 0.0
    %1652 = vmatprep.subr.mxu0 0.0
    %1653 = vmatpush2.msra.mxu0 0.0
    %1654 = vmatprep.subr.mxu0 0.0
    %1655 = vmatpush2.msra.mxu0 0.0
    %1656 = vmatprep.subr.mxu0 0.0
    %1657 = vmatpush2.msra.mxu0 0.0
    %1658 = vmatprep.subr.mxu0 0.0
    %1659 = vmatpush2.msra.mxu0 0.0
    %1660 = vmatprep.subr.mxu0 0.0
    %1661 = vmatpush2.msra.mxu0 0.0
    %1662 = vmatprep.subr.mxu0 0.0
    %1663 = vmatpush2.msra.mxu0 0.0
    %1664 = vmatprep.subr.mxu0 0.0
    %1665 = vmatpush2.msra.mxu0 0.0
    %1666 = vmatprep.subr.mxu0 0.0
    %1667 = vmatpush2.msra.mxu0 0.0
    %1668 = vmatprep.mubr.f32.mxu0 0.0
    %v1669 = vand.u32 %v1113, 4294901760
    %1670 = vmatmul.mubr.f32.gmra.mxu0 %v1669
    %v1671 = vpop.f32.mrf.mxu0
    %v1672 = vadd.f32 %v1553, %v1671
    %v1673 = vpop.f32.mrf.mxu0
    %1674 = vmatprep.mubr.f32.mxu0 0.0
    %v1675 = vand.u32 %v1116, 4294901760
    %1676 = vmatmul.mubr.f32.gmra.mxu0 %v1675
    %v1677 = vpop.f32.mrf.mxu0
    %v1678 = vadd.f32 %v1561, %v1677
    %v1679 = vpop.f32.mrf.mxu0
    %1680 = vmatprep.mubr.f32.mxu0 0.0
    %v1681 = vand.u32 %v1119, 4294901760
    %1682 = vmatmul.mubr.f32.gmra.mxu0 %v1681
    %v1683 = vpop.f32.mrf.mxu0
    %v1684 = vadd.f32 %v1569, %v1683
    %v1685 = vpop.f32.mrf.mxu0
    %1686 = vmatprep.mubr.f32.mxu0 0.0
    %v1687 = vand.u32 %v1122, 4294901760
    %1688 = vmatmul.mubr.f32.gmra.mxu0 %v1687
    %v1689 = vpop.f32.mrf.mxu0
    %v1690 = vadd.f32 %v1577, %v1689
    %v1691 = vpop.f32.mrf.mxu0
    %1692 = vdwg.mxu0
    %1693 = vmatprep.subr.mxu0 0.0
    %1694 = vmatpush1.msra.mxu0 0.0
    %1695 = vmatprep.subr.mxu0 0.0
    %1696 = vmatpush1.msra.mxu0 0.0
    %1697 = vmatprep.subr.mxu0 0.0
    %1698 = vmatpush1.msra.mxu0 0.0
    %1699 = vmatprep.subr.mxu0 0.0
    %1700 = vmatpush1.msra.mxu0 0.0
    %1701 = vmatprep.subr.mxu0 0.0
    %1702 = vmatpush1.msra.mxu0 0.0
    %1703 = vmatprep.subr.mxu0 0.0
    %1704 = vmatpush1.msra.mxu0 0.0
    %1705 = vmatprep.subr.mxu0 0.0
    %1706 = vmatpush1.msra.mxu0 0.0
    %1707 = vmatprep.subr.mxu0 0.0
    %1708 = vmatpush1.msra.mxu0 0.0
    %1709 = vmatprep.subr.mxu0 0.0
    %v1710 = vand.u32 %v1110, 4294901760
    %1711 = vmatpush1.msra.mxu0 %v1710
    %1712 = vmatprep.subr.mxu0 0.0
    %v1713 = vand.u32 %v1109, 4294901760
    %1714 = vmatpush1.msra.mxu0 %v1713
    %1715 = vmatprep.subr.mxu0 0.0
    %v1716 = vand.u32 %v1108, 4294901760
    %1717 = vmatpush1.msra.mxu0 %v1716
    %1718 = vmatprep.subr.mxu0 0.0
    %v1719 = vand.u32 %v1107, 4294901760
    %1720 = vmatpush1.msra.mxu0 %v1719
    %1721 = vmatprep.subr.mxu0 0.0
    %v1722 = vand.u32 %v1106, 4294901760
    %1723 = vmatpush1.msra.mxu0 %v1722
    %1724 = vmatprep.subr.mxu0 0.0
    %v1725 = vand.u32 %v1105, 4294901760
    %1726 = vmatpush1.msra.mxu0 %v1725
    %1727 = vmatprep.subr.mxu0 0.0
    %v1728 = vand.u32 %v1104, 4294901760
    %1729 = vmatpush1.msra.mxu0 %v1728
    %1730 = vmatprep.subr.mxu0 0.0
    %v1731 = vand.u32 %v1103, 4294901760
    %1732 = vmatpush1.msra.mxu0 %v1731
    %1733 = vmatprep.subr.mxu0 0.0
    %1734 = vmatpush2.msra.mxu0 0.0
    %1735 = vmatprep.subr.mxu0 0.0
    %1736 = vmatpush2.msra.mxu0 0.0
    %1737 = vmatprep.subr.mxu0 0.0
    %1738 = vmatpush2.msra.mxu0 0.0
    %1739 = vmatprep.subr.mxu0 0.0
    %1740 = vmatpush2.msra.mxu0 0.0
    %1741 = vmatprep.subr.mxu0 0.0
    %1742 = vmatpush2.msra.mxu0 0.0
    %1743 = vmatprep.subr.mxu0 0.0
    %1744 = vmatpush2.msra.mxu0 0.0
    %1745 = vmatprep.subr.mxu0 0.0
    %1746 = vmatpush2.msra.mxu0 0.0
    %1747 = vmatprep.subr.mxu0 0.0
    %1748 = vmatpush2.msra.mxu0 0.0
    %1749 = vmatprep.subr.mxu0 0.0
    %1750 = vmatpush2.msra.mxu0 0.0
    %1751 = vmatprep.subr.mxu0 0.0
    %1752 = vmatpush2.msra.mxu0 0.0
    %1753 = vmatprep.subr.mxu0 0.0
    %1754 = vmatpush2.msra.mxu0 0.0
    %1755 = vmatprep.subr.mxu0 0.0
    %1756 = vmatpush2.msra.mxu0 0.0
    %1757 = vmatprep.subr.mxu0 0.0
    %1758 = vmatpush2.msra.mxu0 0.0
    %1759 = vmatprep.subr.mxu0 0.0
    %1760 = vmatpush2.msra.mxu0 0.0
    %1761 = vmatprep.subr.mxu0 0.0
    %1762 = vmatpush2.msra.mxu0 0.0
    %1763 = vmatprep.subr.mxu0 0.0
    %1764 = vmatpush2.msra.mxu0 0.0
    %1765 = vmatprep.mubr.f32.mxu0 0.0
    %v1766 = vand.u32 %v1113, 4294901760
    %1767 = vmatmul.mubr.f32.gmra.mxu0 %v1766
    %v1768 = vpop.f32.mrf.mxu0
    %v1769 = vadd.f32 %v1672, %v1768
    %v1770 = vpop.f32.mrf.mxu0
    %1771 = vmatprep.mubr.f32.mxu0 0.0
    %v1772 = vand.u32 %v1116, 4294901760
    %1773 = vmatmul.mubr.f32.gmra.mxu0 %v1772
    %v1774 = vpop.f32.mrf.mxu0
    %v1775 = vadd.f32 %v1678, %v1774
    %v1776 = vpop.f32.mrf.mxu0
    %1777 = vmatprep.mubr.f32.mxu0 0.0
    %v1778 = vand.u32 %v1119, 4294901760
    %1779 = vmatmul.mubr.f32.gmra.mxu0 %v1778
    %v1780 = vpop.f32.mrf.mxu0
    %v1781 = vadd.f32 %v1684, %v1780
    %v1782 = vpop.f32.mrf.mxu0
    %1783 = vmatprep.mubr.f32.mxu0 0.0
    %v1784 = vand.u32 %v1122, 4294901760
    %1785 = vmatmul.mubr.f32.gmra.mxu0 %v1784
    %v1786 = vpop.f32.mrf.mxu0
    %v1787 = vadd.f32 %v1690, %v1786
    %v1788 = vpop.f32.mrf.mxu0
    %1789 = vdwg.mxu0
    %v1790 = vld [vmem:[%s4] sm:$0x3]
    %v1791 = vsel %vm1111, %v1769, 0.0
    %v1792 = vsel %vm1111, %v1775, 0.0
    %v1793 = vadd.f32 %v1791, %v1792
    %v1794 = vsel %vm1111, %v1781, 0.0
    %v1795 = vadd.f32 %v1793, %v1794
    %v1796 = vsel %vm1111, %v1787, 0.0
    %v1797 = vadd.f32 %v1795, %v1796
    %v1798 = vrot.slane %v1797, 4
    %v1799 = vadd.f32 %v1797, %v1798
    %v1800 = vrot.slane %v1799, 2
    %v1801 = vadd.f32 %v1799, %v1800
    %v1802 = vrot.slane %v1801, 1
    %v1803 = vadd.f32 %v1801, %v1802
    %v1804 = vrcp.pop 32.0
    %v1805 = vmul.f32 %v1803, %v1804
    %v1806 = vsub.f32 %v1769, %v1805
    %v1807 = vsub.f32 %v1775, %v1805
    %v1808 = vsub.f32 %v1781, %v1805
    %v1809 = vsub.f32 %v1787, %v1805
    %v1810 = vmul.f32 %v1806, %v1806
    %v1811 = vmul.f32 %v1807, %v1807
    %v1812 = vmul.f32 %v1808, %v1808
    %v1813 = vmul.f32 %v1809, %v1809
    %v1814 = vsel %vm1111, %v1810, 0.0
    %v1815 = vsel %vm1111, %v1811, 0.0
    %v1816 = vadd.f32 %v1814, %v1815
    %v1817 = vsel %vm1111, %v1812, 0.0
    %v1818 = vadd.f32 %v1816, %v1817
    %v1819 = vsel %vm1111, %v1813, 0.0
    %v1820 = vadd.f32 %v1818, %v1819
    %v1821 = vrot.slane %v1820, 4
    %v1822 = vadd.f32 %v1820, %v1821
    %v1823 = vrot.slane %v1822, 2
    %v1824 = vadd.f32 %v1822, %v1823
    %v1825 = vrot.slane %v1824, 1
    %v1826 = vadd.f32 %v1824, %v1825
    %v1827 = vmul.f32 %v1826, %v1804
    %v1828 = vadd.f32 %v1827, 1e-05
    %v1829 = vrsqrt.pop %v1828
    %v1830 = vmul.f32 %v1806, %v1829
    %v1831 = vmul.f32 %v1807, %v1829
    %v1832 = vmul.f32 %v1808, %v1829
    %v1833 = vmul.f32 %v1809, %v1829
    %v1834 = vlaneseq
    %v1835 = vshrl.u32 %v1834, 7
    %v1836 = vsub.s32 0, %v1835
    %v1837 = vrot.slane %v1790, %v1836
    %v1838 = vmul.f32 %v1830, %v1837
    %v1839 = vmul.f32 %v1831, %v1837
    %v1840 = vmul.f32 %v1832, %v1837
    %v1841 = vmul.f32 %v1833, %v1837
    %v1842 = vlaneseq
    %v1843 = vshrl.u32 %v1842, 7
    %v1844 = vsub.s32 1, %v1843
    %v1845 = vrot.slane %v1790, %v1844
    %v1846 = vadd.f32 %v1838, %v1845
    %v1847 = vadd.f32 %v1839, %v1845
    %v1848 = vadd.f32 %v1840, %v1845
    %v1849 = vadd.f32 %v1841, %v1845
    %v1850 = vmax.f32 %v1846, 0.0
    %v1851 = vmax.f32 %v1847, 0.0
    %v1852 = vmax.f32 %v1848, 0.0
    %v1853 = vmax.f32 %v1849, 0.0
    %1854 = vst.msk [vmem:[#allocation7] sm:$0xff] %vm1111, %v1850
    %1855 = vst.msk [vmem:[#allocation7 + $0x8] sm:$0xff] %vm1111, %v1851
    %1856 = vst.msk [vmem:[#allocation7 + $0x10] sm:$0xff] %vm1111, %v1852
    %1857 = vst.msk [vmem:[#allocation7 + $0x18] sm:$0xff] %vm1111, %v1853
    // Predicated region
    $region30: #{tpu_custom_call.1} parent=1 // pred_check
      _
    $region31: #{tpu_custom_call.1} parent=1 // pred_check_branch
      %1859 = sbr.rel (0) target = $region33
    $region32: #{tpu_custom_call.1} parent=1 // pred_region
      %s1861 = ssub.s32 512, 512
      %1862 = vsyncadd [#allocation4], %s1861
      %s1863 = sshll.u32 [#allocation7], 4
      %s1864 = int_to_ptr.vmem [resolvable:$true] %s1863
      %1869 = dma.vmem_to_hbm [thread:$0]  %s1864, 512, %s5, [#allocation4], 128, 128, 8
    $region33: #{tpu_custom_call.1} parent=1 // pred_fallthru
      _
    // Predicated region
    $region34: #{tpu_custom_call.1} parent=1 // pred_check
      _
    $region35: #{tpu_custom_call.1} parent=1 // pred_check_branch
      %1871 = sbr.rel (0) target = $region37
    $region36: #{tpu_custom_call.1} parent=1 // pred_region
      %1872 = dma.done [#allocation4], 512
    $region37: #{tpu_custom_call.1} parent=1 // pred_fallthru
      _
    %1873 = vsyncpa [#allocation3], 1
    %1874 = vsyncpa [#allocation6], 1
    %1875 = vsyncpa [#allocation4], 1

</llo_original>
